<compile_context>
chip_gen: v7x
topology: tpu7x:2x2x1
jax: 0.10.0
libtpu: 0.0.40
codegen_flags: <defaults>
</compile_context>

<pallas_src>
import jax
import jax.numpy as jnp
from jax import lax
from jax.experimental import pallas as pl
from jax.experimental.pallas import tpu as pltpu

# ---------------- configuration (small synthetic shapes) ----------------
N      = 2
C_IN   = 4
C_OUT  = 8
H_IN   = 16
W_IN   = 16
KSIZE  = 3
STRIDE = 1
PAD    = 1
HID    = 2 * max(C_IN, C_OUT)              # 16
SCN_KH = max(H_IN // 8, 1)                 # 2
SCN_KW = max(W_IN // 8, 1)                 # 2
EPS_SCN   = 1e-5
EPS_GN    = 1e-5
NEG_SLOPE = 0.01

# The fused kernel specializes the (kernel_size, stride, padding) = (3, 1, 1)
# configuration used below (output spatial size == input spatial size).
assert (KSIZE, STRIDE, PAD) == (3, 1, 1)
H1 = (H_IN + 2 * PAD - KSIZE) // STRIDE + 1          # 16
W1 = (W_IN + 2 * PAD - KSIZE) // STRIDE + 1          # 16
assert (H1, W1) == (H_IN, W_IN)

P     = H1 * W1                                      # 256 (lane dimension)
K1    = KSIZE * KSIZE * C_IN                         # 36
K3    = 3 * 3 * HID                                  # 144
BASE  = 128                                          # lane-aligned image start
assert BASE >= W_IN + 1                              # enough left zero margin
PADW  = BASE + P + 128                               # 512 lanes (zero margins)
assert PADW >= BASE + P + W_IN + 1                   # enough right zero margin
TAPS9 = tuple((dy, dx) for dy in (-1, 0, 1) for dx in (-1, 0, 1))


# ---------------------------------------------------------------------------
# Fused kernel: SCN + conv1/res (K=36 matmul) + GN + LReLU + 1x1 conv +
#               GN + LReLU + conv3 (K=144 matmul), one sample per grid step.
# ---------------------------------------------------------------------------
def cnn_block_kernel(x_ref, wcat_ref, bcat_ref, w2_ref, b2_ref, w3_ref, b3_ref,
                     o_ref, img_ref, patch_ref):
    # img_ref:   (HID, PADW) f32 lane-padded flattened image (zero margins).
    # patch_ref: (K3, P)     f32 im2col patch matrix (rows = tap-major).

    # Zero only the margins (lane-aligned 128-wide stores); the image region
    # is always overwritten before each read.
    img_ref[:, 0:BASE] = jnp.zeros((HID, BASE), jnp.float32)
    img_ref[:, BASE + P:PADW] = jnp.zeros((HID, PADW - BASE - P), jnp.float32)

    x = x_ref[0]                                              # (C_IN, P) f32

    # Hoisted per-pixel column index & column-wrap masks (reused everywhere).
    col = lax.broadcasted_iota(jnp.int32, (1, P), 1) % W_IN   # pixel column
    ok_p1 = (col + 1) < W_IN                                  # dx = +1 valid
    ok_m1 = col >= 1                                          # dx = -1 valid
    dx_mask = {-1: ok_m1, 1: ok_p1}

    # ---- SpatialContrastNorm: local mean/std over SCN_KH x SCN_KW window ----
    img_ref[0:C_IN, BASE:BASE + P] = x
    s1 = jnp.zeros((C_IN, P), jnp.float32)
    s2 = jnp.zeros((C_IN, P), jnp.float32)
    for dy in range(SCN_KH):
        for dx in range(SCN_KW):
            off = BASE + dy * W_IN + dx
            t = img_ref[0:C_IN, off:off + P]
            if dx != 0:
                t = jnp.where(dx_mask[dx], t, 0.0)            # kill column wrap
            s1 = s1 + t
            s2 = s2 + t * t
    cnt = float(SCN_KH * SCN_KW)
    mean = s1 / cnt
    var = jnp.maximum(s2 / cnt - mean * mean, 0.0)
    xn = (x - mean) * lax.rsqrt(var + EPS_SCN)                # (C_IN, P) f32

    def write_taps(rows):
        # Pack the 9 shifted/zero-padded taps of img_ref[0:rows] into patch_ref.
        for t_idx, (dy, dx) in enumerate(TAPS9):
            off = BASE + dy * W_IN + dx
            v = img_ref[0:rows, off:off + P]
            if dx != 0:
                v = jnp.where(dx_mask[dx], v, 0.0)
            patch_ref[t_idx * rows:(t_idx + 1) * rows, :] = v

    # ---- conv1 + residual conv: one fused K=36 bf16 matmul (shared patches) ----
    img_ref[0:C_IN, BASE:BASE + P] = xn
    write_taps(C_IN)
    patches1 = patch_ref[0:K1, :].astype(jnp.bfloat16)        # (36, P)
    y = jnp.dot(wcat_ref[...], patches1,
                preferred_element_type=jnp.float32) + bcat_ref[...]
    h = y[0:HID, :]                                           # conv1 out (16, P)
    res = y[HID:HID + C_OUT, :]                               # residual  (8, P)

    # ---- GroupNorm(1, hid, affine=False) + LeakyReLU, single-pass stats ----
    def group_norm_leaky(v):
        n = float(v.shape[0] * v.shape[1])
        s = jnp.sum(v)
        ss = jnp.sum(v * v)
        m = s / n
        var_v = jnp.maximum(ss / n - m * m, 0.0)
        v = (v - m) * lax.rsqrt(var_v + EPS_GN)
        return jnp.where(v >= 0, v, NEG_SLOPE * v)

    h = group_norm_leaky(h)

    # ---- conv2 (1x1) == (HID, HID) @ (HID, P) matmul ----
    h = jnp.dot(w2_ref[...], h.astype(jnp.bfloat16),
                preferred_element_type=jnp.float32) + b2_ref[...]
    h = group_norm_leaky(h)

    # ---- conv3 (3x3, pad 1): one K=144 bf16 matmul over in-kernel im2col ----
    img_ref[0:HID, BASE:BASE + P] = h
    write_taps(HID)
    patches3 = patch_ref[...].astype(jnp.bfloat16)            # (144, P)
    conv3 = jnp.dot(w3_ref[...], patches3,
                    preferred_element_type=jnp.float32) + b3_ref[...]

    o_ref[0] = res + conv3                                    # (C_OUT, P)


# ---------------------------------------------------------------------------
# Host wrapper
# ---------------------------------------------------------------------------
def _oihw_to_mat(w):
    """(O, I, kh, kw) -> (O, kh*kw*I); column order = (ky, kx, c_in)."""
    o, i, kh, kw = w.shape
    return jnp.transpose(w, (0, 2, 3, 1)).reshape(o, kh * kw * i)


def cnn_block_forward(x, params):
    (w1, b1), (w2, b2), (w3, b3), (wres, bres) = params

    x_flat = x.reshape(N, C_IN, P).astype(jnp.float32)

    wcat = jnp.concatenate([_oihw_to_mat(w1), _oihw_to_mat(wres)], axis=0)
    wcat = wcat.astype(jnp.bfloat16)                          # (HID+C_OUT, 36)
    bcat = jnp.concatenate([b1, bres], axis=0).reshape(HID + C_OUT, 1)
    w2m = w2[:, :, 0, 0].astype(jnp.bfloat16)                 # (HID, HID)
    b2r = b2.reshape(HID, 1)
    w3m = _oihw_to_mat(w3).astype(jnp.bfloat16)               # (C_OUT, 144)
    b3r = b3.reshape(C_OUT, 1)

    out = pl.pallas_call(
        cnn_block_kernel,
        out_shape=jax.ShapeDtypeStruct((N, C_OUT, P), jnp.float32),
        grid=(N,),
        in_specs=[
            pl.BlockSpec((1, C_IN, P), lambda b: (b, 0, 0)),
            pl.BlockSpec((HID + C_OUT, K1), lambda b: (0, 0)),
            pl.BlockSpec((HID + C_OUT, 1), lambda b: (0, 0)),
            pl.BlockSpec((HID, HID), lambda b: (0, 0)),
            pl.BlockSpec((HID, 1), lambda b: (0, 0)),
            pl.BlockSpec((C_OUT, K3), lambda b: (0, 0)),
            pl.BlockSpec((C_OUT, 1), lambda b: (0, 0)),
        ],
        out_specs=pl.BlockSpec((1, C_OUT, P), lambda b: (b, 0, 0)),
        scratch_shapes=[
            pltpu.VMEM((HID, PADW), jnp.float32),             # padded image
            pltpu.VMEM((K3, P), jnp.float32),                 # patch matrix
        ],
        compiler_params=pltpu.CompilerParams(
            dimension_semantics=("parallel",)),
    )(x_flat, wcat, bcat, w2m, b2r, w3m, b3r)

    return out.reshape(N, C_OUT, H1, W1)                      # NCHW directly


# ---------------------------------------------------------------------------
# Pure-JAX reference (same math, independent lowering) for a sanity check
# ---------------------------------------------------------------------------
def _conv_ref(x, w, b, stride, pad):
    y = lax.conv_general_dilated(x, w, (stride, stride), ((pad, pad), (pad, pad)),
                                 dimension_numbers=("NCHW", "OIHW", "NCHW"),
                                 precision=lax.Precision.HIGHEST)
    return y + b[None, :, None, None]


def _gn_ref(x):
    m = jnp.mean(x, axis=(1, 2, 3), keepdims=True)
    v = jnp.mean((x - m) ** 2, axis=(1, 2, 3), keepdims=True)
    return (x - m) / jnp.sqrt(v + EPS_GN)


def _leaky_ref(x):
    return jnp.where(x >= 0, x, NEG_SLOPE * x)


def _scn_ref(x):
    xp  = jnp.pad(x, ((0, 0), (0, 0), (0, SCN_KH - 1), (0, SCN_KW - 1)))
    xp2 = jnp.pad(x * x, ((0, 0), (0, 0), (0, SCN_KH - 1), (0, SCN_KW - 1)))
    s1 = sum(xp[:, :, dy:dy + H_IN, dx:dx + W_IN]
             for dy in range(SCN_KH) for dx in range(SCN_KW))
    s2 = sum(xp2[:, :, dy:dy + H_IN, dx:dx + W_IN]
             for dy in range(SCN_KH) for dx in range(SCN_KW))
    cnt = float(SCN_KH * SCN_KW)
    mean = s1 / cnt
    var = jnp.maximum(s2 / cnt - mean * mean, 0.0)
    return (x - mean) / jnp.sqrt(var + EPS_SCN)


def reference_forward(x, params):
    (w1, b1), (w2, b2), (w3, b3), (wres, bres) = params
    xn = _scn_ref(x)
    h = _leaky_ref(_gn_ref(_conv_ref(xn, w1, b1, STRIDE, PAD)))
    h = _leaky_ref(_gn_ref(_conv_ref(h, w2, b2, 1, 0)))
    h = _conv_ref(h, w3, b3, 1, 1)
    res = _conv_ref(xn, wres, bres, STRIDE, PAD)
    return res + h


# ---------------------------------------------------------------------------
def init_conv(key, c_out, c_in, kh, kw):
    kw_key, kb_key = jax.random.split(key)
    bound = 1.0 / (c_in * kh * kw) ** 0.5
    w = jax.random.uniform(kw_key, (c_out, c_in, kh, kw), jnp.float32, -bound, bound)
    b = jax.random.uniform(kb_key, (c_out,), jnp.float32, -bound, bound)
    return w, b


if __name__ == "__main__":
    root = jax.random.PRNGKey(0)
    kx, k1, k2, k3, k4 = jax.random.split(root, 5)

    x = jax.random.normal(kx, (N, C_IN, H_IN, W_IN), jnp.float32)

    params = (
        init_conv(k1, HID, C_IN, KSIZE, KSIZE),    # conv1
        init_conv(k2, HID, HID, 1, 1),             # conv2 (1x1)
        init_conv(k3, C_OUT, HID, 3, 3),           # conv3 (3x3, pad 1)
        init_conv(k4, C_OUT, C_IN, KSIZE, KSIZE),  # res_path
    )

    y = cnn_block_forward(x, params)
    jax.block_until_ready(y)

    y_ref = reference_forward(x, params)
    assert y.shape == (N, C_OUT, H1, W1)
    max_err = float(jnp.max(jnp.abs(y - y_ref)))
    # bf16 MXU inputs with f32 accumulation -> 2e-2 tolerance vs f32 reference.
    assert jnp.allclose(y, y_ref, rtol=2e-2, atol=2e-2), max_err

    print("KERNEL_OK")
</pallas_src>

<mosaic_0001>
module attributes {stable_mosaic.version = 11 : i64} {
  func.func @cnn_block_kernel(%arg0: i32, %arg1: memref<1x4x256xf32, #tpu.memory_space<vmem>>, %arg2: memref<24x36xbf16, #tpu.memory_space<vmem>>, %arg3: memref<24x1xf32, #tpu.memory_space<vmem>>, %arg4: memref<16x16xbf16, #tpu.memory_space<vmem>>, %arg5: memref<16x1xf32, #tpu.memory_space<vmem>>, %arg6: memref<8x144xbf16, #tpu.memory_space<vmem>>, %arg7: memref<8x1xf32, #tpu.memory_space<vmem>>, %arg8: memref<1x8x256xf32, #tpu.memory_space<vmem>>, %arg9: memref<16x512xf32, #tpu.memory_space<vmem>>, %arg10: memref<144x256xf32, #tpu.memory_space<vmem>>) attributes {dimension_semantics = [#tpu.dimension_semantics<parallel>], iteration_bounds = array<i64: 2>, scalar_prefetch = 0 : i64, scratch_operands = 2 : i64, tpu.core_type = #tpu.core_type<tc>, window_params = [{transform_indices = @transform_0, window_bounds = array<i64: 1, 4, 256>}, {pipeline_mode = #tpu.pipeline_mode<synchronous>, transform_indices = @transform_1, window_bounds = array<i64: 24, 36>}, {pipeline_mode = #tpu.pipeline_mode<synchronous>, transform_indices = @transform_2, window_bounds = array<i64: 24, 1>}, {pipeline_mode = #tpu.pipeline_mode<synchronous>, transform_indices = @transform_3, window_bounds = array<i64: 16, 16>}, {pipeline_mode = #tpu.pipeline_mode<synchronous>, transform_indices = @transform_4, window_bounds = array<i64: 16, 1>}, {pipeline_mode = #tpu.pipeline_mode<synchronous>, transform_indices = @transform_5, window_bounds = array<i64: 8, 144>}, {pipeline_mode = #tpu.pipeline_mode<synchronous>, transform_indices = @transform_6, window_bounds = array<i64: 8, 1>}, {transform_indices = @transform_7, window_bounds = array<i64: 1, 8, 256>}]} {
    %cst = arith.constant 0.000000e+00 : f32
    %0 = vector.broadcast %cst : f32 to vector<16x128xf32>
    %c0 = arith.constant 0 : index
    %c0_0 = arith.constant 0 : index
    %1 = vector.load %arg9[%c0, %c0_0] : memref<16x512xf32, #tpu.memory_space<vmem>>, vector<16x128xf32>
    tpu.vector_store %arg9[%c0, %c0_0], %0 {strides = array<i32>} : memref<16x512xf32, #tpu.memory_space<vmem>>, vector<16x128xf32>,
    %cst_1 = arith.constant 0.000000e+00 : f32
    %2 = vector.broadcast %cst_1 : f32 to vector<16x128xf32>
    %c0_2 = arith.constant 0 : index
    %c384 = arith.constant 384 : index
    %3 = vector.load %arg9[%c0_2, %c384] : memref<16x512xf32, #tpu.memory_space<vmem>>, vector<16x128xf32>
    tpu.vector_store %arg9[%c0_2, %c384], %2 {strides = array<i32>} : memref<16x512xf32, #tpu.memory_space<vmem>>, vector<16x128xf32>,
    %c0_3 = arith.constant 0 : index
    %c0_4 = arith.constant 0 : index
    %c0_5 = arith.constant 0 : index
    %4 = vector.load %arg1[%c0_3, %c0_4, %c0_5] : memref<1x4x256xf32, #tpu.memory_space<vmem>>, vector<1x4x256xf32>
    %5 = vector.shape_cast %4 : vector<1x4x256xf32> to vector<4x256xf32>
    %6 = tpu.iota {dimensions = array<i32: 1>} : vector<1x256xi32>
    %c16_i32 = arith.constant 16 : i32
    %c0_i32 = arith.constant 0 : i32
    %7 = arith.cmpi eq, %c16_i32, %c0_i32 : i32
    %c1_i32 = arith.constant 1 : i32
    %8 = arith.select %7, %c1_i32, %c16_i32 : i32
    %9 = vector.broadcast %8 : i32 to vector<1x256xi32>
    %10 = arith.remsi %6, %9 : vector<1x256xi32>
    %c0_i32_6 = arith.constant 0 : i32
    %11 = vector.broadcast %c0_i32_6 : i32 to vector<1x256xi32>
    %12 = arith.cmpi ne, %10, %11 : vector<1x256xi32>
    %c0_i32_7 = arith.constant 0 : i32
    %13 = vector.broadcast %c0_i32_7 : i32 to vector<1x256xi32>
    %14 = arith.cmpi slt, %10, %13 : vector<1x256xi32>
    %c0_i32_8 = arith.constant 0 : i32
    %15 = arith.cmpi slt, %8, %c0_i32_8 : i32
    %16 = vector.broadcast %15 : i1 to vector<1x256xi1>
    %17 = vector.broadcast %16 : vector<1x256xi1> to vector<1x256xi1>
    %18 = arith.xori %14, %17 : vector<1x256xi1>
    %19 = arith.andi %18, %12 : vector<1x256xi1>
    %20 = vector.broadcast %8 : i32 to vector<1x256xi32>
    %21 = arith.addi %10, %20 : vector<1x256xi32>
    %22 = arith.select %19, %21, %10 : vector<1x256xi1>, vector<1x256xi32>
    %c1_i32_9 = arith.constant 1 : i32
    %23 = vector.broadcast %c1_i32_9 : i32 to vector<1x256xi32>
    %24 = arith.addi %22, %23 : vector<1x256xi32>
    %c16_i32_10 = arith.constant 16 : i32
    %25 = vector.broadcast %c16_i32_10 : i32 to vector<1x256xi32>
    %26 = arith.cmpi slt, %24, %25 : vector<1x256xi32>
    %c1_i32_11 = arith.constant 1 : i32
    %27 = vector.broadcast %c1_i32_11 : i32 to vector<1x256xi32>
    %28 = arith.cmpi sge, %22, %27 : vector<1x256xi32>
    %c0_12 = arith.constant 0 : index
    %c128 = arith.constant 128 : index
    %29 = vector.load %arg9[%c0_12, %c128] : memref<16x512xf32, #tpu.memory_space<vmem>>, vector<4x256xf32>
    tpu.vector_store %arg9[%c0_12, %c128], %5 {strides = array<i32>} : memref<16x512xf32, #tpu.memory_space<vmem>>, vector<4x256xf32>,
    %cst_13 = arith.constant 0.000000e+00 : f32
    %30 = vector.broadcast %cst_13 : f32 to vector<4x256xf32>
    %cst_14 = arith.constant 0.000000e+00 : f32
    %31 = vector.broadcast %cst_14 : f32 to vector<4x256xf32>
    %c0_15 = arith.constant 0 : index
    %c128_16 = arith.constant 128 : index
    %32 = vector.load %arg9[%c0_15, %c128_16] : memref<16x512xf32, #tpu.memory_space<vmem>>, vector<4x256xf32>
    %33 = arith.addf %30, %32 : vector<4x256xf32>
    %34 = arith.mulf %32, %32 : vector<4x256xf32>
    %35 = arith.addf %31, %34 : vector<4x256xf32>
    %c0_17 = arith.constant 0 : index
    %c129 = arith.constant 129 : index
    %36 = vector.load %arg9[%c0_17, %c129] : memref<16x512xf32, #tpu.memory_space<vmem>>, vector<4x256xf32>
    %cst_18 = arith.constant 0.000000e+00 : f32
    %37 = vector.shape_cast %26 : vector<1x256xi1> to vector<1x256xi1>
    %38 = vector.broadcast %37 : vector<1x256xi1> to vector<4x256xi1>
    %39 = vector.broadcast %cst_18 : f32 to vector<4x256xf32>
    %40 = arith.select %38, %36, %39 : vector<4x256xi1>, vector<4x256xf32>
    %41 = arith.addf %33, %40 : vector<4x256xf32>
    %42 = arith.mulf %40, %40 : vector<4x256xf32>
    %43 = arith.addf %35, %42 : vector<4x256xf32>
    %c0_19 = arith.constant 0 : index
    %c144 = arith.constant 144 : index
    %44 = vector.load %arg9[%c0_19, %c144] : memref<16x512xf32, #tpu.memory_space<vmem>>, vector<4x256xf32>
    %45 = arith.addf %41, %44 : vector<4x256xf32>
    %46 = arith.mulf %44, %44 : vector<4x256xf32>
    %47 = arith.addf %43, %46 : vector<4x256xf32>
    %c0_20 = arith.constant 0 : index
    %c145 = arith.constant 145 : index
    %48 = vector.load %arg9[%c0_20, %c145] : memref<16x512xf32, #tpu.memory_space<vmem>>, vector<4x256xf32>
    %cst_21 = arith.constant 0.000000e+00 : f32
    %49 = vector.shape_cast %26 : vector<1x256xi1> to vector<1x256xi1>
    %50 = vector.broadcast %49 : vector<1x256xi1> to vector<4x256xi1>
    %51 = vector.broadcast %cst_21 : f32 to vector<4x256xf32>
    %52 = arith.select %50, %48, %51 : vector<4x256xi1>, vector<4x256xf32>
    %53 = arith.addf %45, %52 : vector<4x256xf32>
    %54 = arith.mulf %52, %52 : vector<4x256xf32>
    %55 = arith.addf %47, %54 : vector<4x256xf32>
    %cst_22 = arith.constant 4.000000e+00 : f32
    %56 = vector.broadcast %cst_22 : f32 to vector<4x256xf32>
    %57 = arith.divf %53, %56 : vector<4x256xf32>
    %cst_23 = arith.constant 4.000000e+00 : f32
    %58 = vector.broadcast %cst_23 : f32 to vector<4x256xf32>
    %59 = arith.divf %55, %58 : vector<4x256xf32>
    %60 = arith.mulf %57, %57 : vector<4x256xf32>
    %61 = arith.subf %59, %60 : vector<4x256xf32>
    %cst_24 = arith.constant 0.000000e+00 : f32
    %62 = vector.broadcast %cst_24 : f32 to vector<4x256xf32>
    %63 = arith.maximumf %61, %62 : vector<4x256xf32>
    %64 = arith.subf %5, %57 : vector<4x256xf32>
    %cst_25 = arith.constant 9.99999974E-6 : f32
    %65 = vector.broadcast %cst_25 : f32 to vector<4x256xf32>
    %66 = arith.addf %63, %65 : vector<4x256xf32>
    %67 = math.rsqrt %66 : vector<4x256xf32>
    %68 = arith.mulf %64, %67 : vector<4x256xf32>
    %c0_26 = arith.constant 0 : index
    %c128_27 = arith.constant 128 : index
    %69 = vector.load %arg9[%c0_26, %c128_27] : memref<16x512xf32, #tpu.memory_space<vmem>>, vector<4x256xf32>
    tpu.vector_store %arg9[%c0_26, %c128_27], %68 {strides = array<i32>} : memref<16x512xf32, #tpu.memory_space<vmem>>, vector<4x256xf32>,
    %c0_28 = arith.constant 0 : index
    %c111 = arith.constant 111 : index
    %70 = vector.load %arg9[%c0_28, %c111] : memref<16x512xf32, #tpu.memory_space<vmem>>, vector<4x256xf32>
    %cst_29 = arith.constant 0.000000e+00 : f32
    %71 = vector.shape_cast %28 : vector<1x256xi1> to vector<1x256xi1>
    %72 = vector.broadcast %71 : vector<1x256xi1> to vector<4x256xi1>
    %73 = vector.broadcast %cst_29 : f32 to vector<4x256xf32>
    %74 = arith.select %72, %70, %73 : vector<4x256xi1>, vector<4x256xf32>
    %c0_30 = arith.constant 0 : index
    %c0_31 = arith.constant 0 : index
    %75 = vector.load %arg10[%c0_30, %c0_31] : memref<144x256xf32, #tpu.memory_space<vmem>>, vector<4x256xf32>
    tpu.vector_store %arg10[%c0_30, %c0_31], %74 {strides = array<i32>} : memref<144x256xf32, #tpu.memory_space<vmem>>, vector<4x256xf32>,
    %c0_32 = arith.constant 0 : index
    %c112 = arith.constant 112 : index
    %76 = vector.load %arg9[%c0_32, %c112] : memref<16x512xf32, #tpu.memory_space<vmem>>, vector<4x256xf32>
    %c4 = arith.constant 4 : index
    %c0_33 = arith.constant 0 : index
    %77 = vector.load %arg10[%c4, %c0_33] : memref<144x256xf32, #tpu.memory_space<vmem>>, vector<4x256xf32>
    tpu.vector_store %arg10[%c4, %c0_33], %76 {strides = array<i32>} : memref<144x256xf32, #tpu.memory_space<vmem>>, vector<4x256xf32>,
    %c0_34 = arith.constant 0 : index
    %c113 = arith.constant 113 : index
    %78 = vector.load %arg9[%c0_34, %c113] : memref<16x512xf32, #tpu.memory_space<vmem>>, vector<4x256xf32>
    %cst_35 = arith.constant 0.000000e+00 : f32
    %79 = vector.shape_cast %26 : vector<1x256xi1> to vector<1x256xi1>
    %80 = vector.broadcast %79 : vector<1x256xi1> to vector<4x256xi1>
    %81 = vector.broadcast %cst_35 : f32 to vector<4x256xf32>
    %82 = arith.select %80, %78, %81 : vector<4x256xi1>, vector<4x256xf32>
    %c8 = arith.constant 8 : index
    %c0_36 = arith.constant 0 : index
    %83 = vector.load %arg10[%c8, %c0_36] : memref<144x256xf32, #tpu.memory_space<vmem>>, vector<4x256xf32>
    tpu.vector_store %arg10[%c8, %c0_36], %82 {strides = array<i32>} : memref<144x256xf32, #tpu.memory_space<vmem>>, vector<4x256xf32>,
    %c0_37 = arith.constant 0 : index
    %c127 = arith.constant 127 : index
    %84 = vector.load %arg9[%c0_37, %c127] : memref<16x512xf32, #tpu.memory_space<vmem>>, vector<4x256xf32>
    %cst_38 = arith.constant 0.000000e+00 : f32
    %85 = vector.shape_cast %28 : vector<1x256xi1> to vector<1x256xi1>
    %86 = vector.broadcast %85 : vector<1x256xi1> to vector<4x256xi1>
    %87 = vector.broadcast %cst_38 : f32 to vector<4x256xf32>
    %88 = arith.select %86, %84, %87 : vector<4x256xi1>, vector<4x256xf32>
    %c12 = arith.constant 12 : index
    %c0_39 = arith.constant 0 : index
    %89 = vector.load %arg10[%c12, %c0_39] : memref<144x256xf32, #tpu.memory_space<vmem>>, vector<4x256xf32>
    tpu.vector_store %arg10[%c12, %c0_39], %88 {strides = array<i32>} : memref<144x256xf32, #tpu.memory_space<vmem>>, vector<4x256xf32>,
    %c0_40 = arith.constant 0 : index
    %c128_41 = arith.constant 128 : index
    %90 = vector.load %arg9[%c0_40, %c128_41] : memref<16x512xf32, #tpu.memory_space<vmem>>, vector<4x256xf32>
    %c16 = arith.constant 16 : index
    %c0_42 = arith.constant 0 : index
    %91 = vector.load %arg10[%c16, %c0_42] : memref<144x256xf32, #tpu.memory_space<vmem>>, vector<4x256xf32>
    tpu.vector_store %arg10[%c16, %c0_42], %90 {strides = array<i32>} : memref<144x256xf32, #tpu.memory_space<vmem>>, vector<4x256xf32>,
    %c0_43 = arith.constant 0 : index
    %c129_44 = arith.constant 129 : index
    %92 = vector.load %arg9[%c0_43, %c129_44] : memref<16x512xf32, #tpu.memory_space<vmem>>, vector<4x256xf32>
    %cst_45 = arith.constant 0.000000e+00 : f32
    %93 = vector.shape_cast %26 : vector<1x256xi1> to vector<1x256xi1>
    %94 = vector.broadcast %93 : vector<1x256xi1> to vector<4x256xi1>
    %95 = vector.broadcast %cst_45 : f32 to vector<4x256xf32>
    %96 = arith.select %94, %92, %95 : vector<4x256xi1>, vector<4x256xf32>
    %c20 = arith.constant 20 : index
    %c0_46 = arith.constant 0 : index
    %97 = vector.load %arg10[%c20, %c0_46] : memref<144x256xf32, #tpu.memory_space<vmem>>, vector<4x256xf32>
    tpu.vector_store %arg10[%c20, %c0_46], %96 {strides = array<i32>} : memref<144x256xf32, #tpu.memory_space<vmem>>, vector<4x256xf32>,
    %c0_47 = arith.constant 0 : index
    %c143 = arith.constant 143 : index
    %98 = vector.load %arg9[%c0_47, %c143] : memref<16x512xf32, #tpu.memory_space<vmem>>, vector<4x256xf32>
    %cst_48 = arith.constant 0.000000e+00 : f32
    %99 = vector.shape_cast %28 : vector<1x256xi1> to vector<1x256xi1>
    %100 = vector.broadcast %99 : vector<1x256xi1> to vector<4x256xi1>
    %101 = vector.broadcast %cst_48 : f32 to vector<4x256xf32>
    %102 = arith.select %100, %98, %101 : vector<4x256xi1>, vector<4x256xf32>
    %c24 = arith.constant 24 : index
    %c0_49 = arith.constant 0 : index
    %103 = vector.load %arg10[%c24, %c0_49] : memref<144x256xf32, #tpu.memory_space<vmem>>, vector<4x256xf32>
    tpu.vector_store %arg10[%c24, %c0_49], %102 {strides = array<i32>} : memref<144x256xf32, #tpu.memory_space<vmem>>, vector<4x256xf32>,
    %c0_50 = arith.constant 0 : index
    %c144_51 = arith.constant 144 : index
    %104 = vector.load %arg9[%c0_50, %c144_51] : memref<16x512xf32, #tpu.memory_space<vmem>>, vector<4x256xf32>
    %c28 = arith.constant 28 : index
    %c0_52 = arith.constant 0 : index
    %105 = vector.load %arg10[%c28, %c0_52] : memref<144x256xf32, #tpu.memory_space<vmem>>, vector<4x256xf32>
    tpu.vector_store %arg10[%c28, %c0_52], %104 {strides = array<i32>} : memref<144x256xf32, #tpu.memory_space<vmem>>, vector<4x256xf32>,
    %c0_53 = arith.constant 0 : index
    %c145_54 = arith.constant 145 : index
    %106 = vector.load %arg9[%c0_53, %c145_54] : memref<16x512xf32, #tpu.memory_space<vmem>>, vector<4x256xf32>
    %cst_55 = arith.constant 0.000000e+00 : f32
    %107 = vector.shape_cast %26 : vector<1x256xi1> to vector<1x256xi1>
    %108 = vector.broadcast %107 : vector<1x256xi1> to vector<4x256xi1>
    %109 = vector.broadcast %cst_55 : f32 to vector<4x256xf32>
    %110 = arith.select %108, %106, %109 : vector<4x256xi1>, vector<4x256xf32>
    %c32 = arith.constant 32 : index
    %c0_56 = arith.constant 0 : index
    %111 = vector.load %arg10[%c32, %c0_56] : memref<144x256xf32, #tpu.memory_space<vmem>>, vector<4x256xf32>
    tpu.vector_store %arg10[%c32, %c0_56], %110 {strides = array<i32>} : memref<144x256xf32, #tpu.memory_space<vmem>>, vector<4x256xf32>,
    %c0_57 = arith.constant 0 : index
    %c0_58 = arith.constant 0 : index
    %112 = vector.load %arg10[%c0_57, %c0_58] : memref<144x256xf32, #tpu.memory_space<vmem>>, vector<36x256xf32>
    %113 = arith.truncf %112 : vector<36x256xf32> to vector<36x256xbf16>
    %c0_59 = arith.constant 0 : index
    %c0_60 = arith.constant 0 : index
    %114 = vector.load %arg2[%c0_59, %c0_60] : memref<24x36xbf16, #tpu.memory_space<vmem>>, vector<24x36xbf16>
    %cst_61 = arith.constant dense<0.000000e+00> : vector<24x256xf32>
    %115 = tpu.matmul %114, %113, %cst_61 {dimension_numbers = #tpu.dot_dimension_numbers<[1], [0], [0], [1], [0, 0, 1, 1], [], []>} : vector<24x36xbf16>, vector<36x256xbf16>, vector<24x256xf32> -> vector<24x256xf32>
    %c0_62 = arith.constant 0 : index
    %c0_63 = arith.constant 0 : index
    %116 = vector.load %arg3[%c0_62, %c0_63] : memref<24x1xf32, #tpu.memory_space<vmem>>, vector<24x1xf32>
    %117 = vector.broadcast %116 : vector<24x1xf32> to vector<24x256xf32>
    %118 = arith.addf %115, %117 : vector<24x256xf32>
    %119 = vector.extract_strided_slice %118 {offsets = [0, 0], sizes = [16, 256], strides = [1, 1]} : vector<24x256xf32> to vector<16x256xf32>
    %120 = vector.extract_strided_slice %118 {offsets = [16, 0], sizes = [8, 256], strides = [1, 1]} : vector<24x256xf32> to vector<8x256xf32>
    %121 = vector.shape_cast %119 : vector<16x256xf32> to vector<1x16x256xf32>
    %cst_64 = arith.constant dense<0.000000e+00> : vector<1xf32>
    %122 = vector.multi_reduction <add>, %121, %cst_64 [1, 2] : vector<1x16x256xf32> to vector<1xf32>
    %123 = vector.shape_cast %122 : vector<1xf32> to vector<1x1x1xf32>
    %124 = vector.extract %123[0, 0, 0] : f32 from vector<1x1x1xf32>
    %125 = arith.mulf %119, %119 : vector<16x256xf32>
    %126 = vector.shape_cast %125 : vector<16x256xf32> to vector<1x16x256xf32>
    %cst_65 = arith.constant dense<0.000000e+00> : vector<1xf32>
    %127 = vector.multi_reduction <add>, %126, %cst_65 [1, 2] : vector<1x16x256xf32> to vector<1xf32>
    %128 = vector.shape_cast %127 : vector<1xf32> to vector<1x1x1xf32>
    %129 = vector.extract %128[0, 0, 0] : f32 from vector<1x1x1xf32>
    %cst_66 = arith.constant 4.096000e+03 : f32
    %130 = arith.divf %124, %cst_66 : f32
    %cst_67 = arith.constant 4.096000e+03 : f32
    %131 = arith.divf %129, %cst_67 : f32
    %132 = arith.mulf %130, %130 : f32
    %133 = arith.subf %131, %132 : f32
    %cst_68 = arith.constant 0.000000e+00 : f32
    %134 = arith.maximumf %133, %cst_68 : f32
    %135 = vector.broadcast %130 : f32 to vector<16x256xf32>
    %136 = arith.subf %119, %135 : vector<16x256xf32>
    %cst_69 = arith.constant 9.99999974E-6 : f32
    %137 = arith.addf %134, %cst_69 : f32
    %138 = math.rsqrt %137 : f32
    %139 = vector.broadcast %138 : f32 to vector<16x256xf32>
    %140 = arith.mulf %136, %139 : vector<16x256xf32>
    %cst_70 = arith.constant 0.000000e+00 : f32
    %141 = vector.broadcast %cst_70 : f32 to vector<16x256xf32>
    %142 = arith.cmpf oge, %140, %141 : vector<16x256xf32>
    %cst_71 = arith.constant 0.00999999977 : f32
    %143 = vector.broadcast %cst_71 : f32 to vector<16x256xf32>
    %144 = arith.mulf %143, %140 : vector<16x256xf32>
    %145 = arith.select %142, %140, %144 : vector<16x256xi1>, vector<16x256xf32>
    %c0_72 = arith.constant 0 : index
    %c0_73 = arith.constant 0 : index
    %146 = vector.load %arg4[%c0_72, %c0_73] : memref<16x16xbf16, #tpu.memory_space<vmem>>, vector<16x16xbf16>
    %147 = arith.truncf %145 : vector<16x256xf32> to vector<16x256xbf16>
    %cst_74 = arith.constant dense<0.000000e+00> : vector<16x256xf32>
    %148 = tpu.matmul %146, %147, %cst_74 {dimension_numbers = #tpu.dot_dimension_numbers<[1], [0], [0], [1], [0, 0, 1, 1], [], []>} : vector<16x16xbf16>, vector<16x256xbf16>, vector<16x256xf32> -> vector<16x256xf32>
    %c0_75 = arith.constant 0 : index
    %c0_76 = arith.constant 0 : index
    %149 = vector.load %arg5[%c0_75, %c0_76] : memref<16x1xf32, #tpu.memory_space<vmem>>, vector<16x1xf32>
    %150 = vector.broadcast %149 : vector<16x1xf32> to vector<16x256xf32>
    %151 = arith.addf %148, %150 : vector<16x256xf32>
    %152 = vector.shape_cast %151 : vector<16x256xf32> to vector<1x16x256xf32>
    %cst_77 = arith.constant dense<0.000000e+00> : vector<1xf32>
    %153 = vector.multi_reduction <add>, %152, %cst_77 [1, 2] : vector<1x16x256xf32> to vector<1xf32>
    %154 = vector.shape_cast %153 : vector<1xf32> to vector<1x1x1xf32>
    %155 = vector.extract %154[0, 0, 0] : f32 from vector<1x1x1xf32>
    %156 = arith.mulf %151, %151 : vector<16x256xf32>
    %157 = vector.shape_cast %156 : vector<16x256xf32> to vector<1x16x256xf32>
    %cst_78 = arith.constant dense<0.000000e+00> : vector<1xf32>
    %158 = vector.multi_reduction <add>, %157, %cst_78 [1, 2] : vector<1x16x256xf32> to vector<1xf32>
    %159 = vector.shape_cast %158 : vector<1xf32> to vector<1x1x1xf32>
    %160 = vector.extract %159[0, 0, 0] : f32 from vector<1x1x1xf32>
    %cst_79 = arith.constant 4.096000e+03 : f32
    %161 = arith.divf %155, %cst_79 : f32
    %cst_80 = arith.constant 4.096000e+03 : f32
    %162 = arith.divf %160, %cst_80 : f32
    %163 = arith.mulf %161, %161 : f32
    %164 = arith.subf %162, %163 : f32
    %cst_81 = arith.constant 0.000000e+00 : f32
    %165 = arith.maximumf %164, %cst_81 : f32
    %166 = vector.broadcast %161 : f32 to vector<16x256xf32>
    %167 = arith.subf %151, %166 : vector<16x256xf32>
    %cst_82 = arith.constant 9.99999974E-6 : f32
    %168 = arith.addf %165, %cst_82 : f32
    %169 = math.rsqrt %168 : f32
    %170 = vector.broadcast %169 : f32 to vector<16x256xf32>
    %171 = arith.mulf %167, %170 : vector<16x256xf32>
    %cst_83 = arith.constant 0.000000e+00 : f32
    %172 = vector.broadcast %cst_83 : f32 to vector<16x256xf32>
    %173 = arith.cmpf oge, %171, %172 : vector<16x256xf32>
    %cst_84 = arith.constant 0.00999999977 : f32
    %174 = vector.broadcast %cst_84 : f32 to vector<16x256xf32>
    %175 = arith.mulf %174, %171 : vector<16x256xf32>
    %176 = arith.select %173, %171, %175 : vector<16x256xi1>, vector<16x256xf32>
    %c0_85 = arith.constant 0 : index
    %c128_86 = arith.constant 128 : index
    %177 = vector.load %arg9[%c0_85, %c128_86] : memref<16x512xf32, #tpu.memory_space<vmem>>, vector<16x256xf32>
    tpu.vector_store %arg9[%c0_85, %c128_86], %176 {strides = array<i32>} : memref<16x512xf32, #tpu.memory_space<vmem>>, vector<16x256xf32>,
    %c0_87 = arith.constant 0 : index
    %c111_88 = arith.constant 111 : index
    %178 = vector.load %arg9[%c0_87, %c111_88] : memref<16x512xf32, #tpu.memory_space<vmem>>, vector<16x256xf32>
    %cst_89 = arith.constant 0.000000e+00 : f32
    %179 = vector.shape_cast %28 : vector<1x256xi1> to vector<1x256xi1>
    %180 = vector.broadcast %179 : vector<1x256xi1> to vector<16x256xi1>
    %181 = vector.broadcast %cst_89 : f32 to vector<16x256xf32>
    %182 = arith.select %180, %178, %181 : vector<16x256xi1>, vector<16x256xf32>
    %c0_90 = arith.constant 0 : index
    %c0_91 = arith.constant 0 : index
    %183 = vector.load %arg10[%c0_90, %c0_91] : memref<144x256xf32, #tpu.memory_space<vmem>>, vector<16x256xf32>
    tpu.vector_store %arg10[%c0_90, %c0_91], %182 {strides = array<i32>} : memref<144x256xf32, #tpu.memory_space<vmem>>, vector<16x256xf32>,
    %c0_92 = arith.constant 0 : index
    %c112_93 = arith.constant 112 : index
    %184 = vector.load %arg9[%c0_92, %c112_93] : memref<16x512xf32, #tpu.memory_space<vmem>>, vector<16x256xf32>
    %c16_94 = arith.constant 16 : index
    %c0_95 = arith.constant 0 : index
    %185 = vector.load %arg10[%c16_94, %c0_95] : memref<144x256xf32, #tpu.memory_space<vmem>>, vector<16x256xf32>
    tpu.vector_store %arg10[%c16_94, %c0_95], %184 {strides = array<i32>} : memref<144x256xf32, #tpu.memory_space<vmem>>, vector<16x256xf32>,
    %c0_96 = arith.constant 0 : index
    %c113_97 = arith.constant 113 : index
    %186 = vector.load %arg9[%c0_96, %c113_97] : memref<16x512xf32, #tpu.memory_space<vmem>>, vector<16x256xf32>
    %cst_98 = arith.constant 0.000000e+00 : f32
    %187 = vector.shape_cast %26 : vector<1x256xi1> to vector<1x256xi1>
    %188 = vector.broadcast %187 : vector<1x256xi1> to vector<16x256xi1>
    %189 = vector.broadcast %cst_98 : f32 to vector<16x256xf32>
    %190 = arith.select %188, %186, %189 : vector<16x256xi1>, vector<16x256xf32>
    %c32_99 = arith.constant 32 : index
    %c0_100 = arith.constant 0 : index
    %191 = vector.load %arg10[%c32_99, %c0_100] : memref<144x256xf32, #tpu.memory_space<vmem>>, vector<16x256xf32>
    tpu.vector_store %arg10[%c32_99, %c0_100], %190 {strides = array<i32>} : memref<144x256xf32, #tpu.memory_space<vmem>>, vector<16x256xf32>,
    %c0_101 = arith.constant 0 : index
    %c127_102 = arith.constant 127 : index
    %192 = vector.load %arg9[%c0_101, %c127_102] : memref<16x512xf32, #tpu.memory_space<vmem>>, vector<16x256xf32>
    %cst_103 = arith.constant 0.000000e+00 : f32
    %193 = vector.shape_cast %28 : vector<1x256xi1> to vector<1x256xi1>
    %194 = vector.broadcast %193 : vector<1x256xi1> to vector<16x256xi1>
    %195 = vector.broadcast %cst_103 : f32 to vector<16x256xf32>
    %196 = arith.select %194, %192, %195 : vector<16x256xi1>, vector<16x256xf32>
    %c48 = arith.constant 48 : index
    %c0_104 = arith.constant 0 : index
    %197 = vector.load %arg10[%c48, %c0_104] : memref<144x256xf32, #tpu.memory_space<vmem>>, vector<16x256xf32>
    tpu.vector_store %arg10[%c48, %c0_104], %196 {strides = array<i32>} : memref<144x256xf32, #tpu.memory_space<vmem>>, vector<16x256xf32>,
    %c0_105 = arith.constant 0 : index
    %c128_106 = arith.constant 128 : index
    %198 = vector.load %arg9[%c0_105, %c128_106] : memref<16x512xf32, #tpu.memory_space<vmem>>, vector<16x256xf32>
    %c64 = arith.constant 64 : index
    %c0_107 = arith.constant 0 : index
    %199 = vector.load %arg10[%c64, %c0_107] : memref<144x256xf32, #tpu.memory_space<vmem>>, vector<16x256xf32>
    tpu.vector_store %arg10[%c64, %c0_107], %198 {strides = array<i32>} : memref<144x256xf32, #tpu.memory_space<vmem>>, vector<16x256xf32>,
    %c0_108 = arith.constant 0 : index
    %c129_109 = arith.constant 129 : index
    %200 = vector.load %arg9[%c0_108, %c129_109] : memref<16x512xf32, #tpu.memory_space<vmem>>, vector<16x256xf32>
    %cst_110 = arith.constant 0.000000e+00 : f32
    %201 = vector.shape_cast %26 : vector<1x256xi1> to vector<1x256xi1>
    %202 = vector.broadcast %201 : vector<1x256xi1> to vector<16x256xi1>
    %203 = vector.broadcast %cst_110 : f32 to vector<16x256xf32>
    %204 = arith.select %202, %200, %203 : vector<16x256xi1>, vector<16x256xf32>
    %c80 = arith.constant 80 : index
    %c0_111 = arith.constant 0 : index
    %205 = vector.load %arg10[%c80, %c0_111] : memref<144x256xf32, #tpu.memory_space<vmem>>, vector<16x256xf32>
    tpu.vector_store %arg10[%c80, %c0_111], %204 {strides = array<i32>} : memref<144x256xf32, #tpu.memory_space<vmem>>, vector<16x256xf32>,
    %c0_112 = arith.constant 0 : index
    %c143_113 = arith.constant 143 : index
    %206 = vector.load %arg9[%c0_112, %c143_113] : memref<16x512xf32, #tpu.memory_space<vmem>>, vector<16x256xf32>
    %cst_114 = arith.constant 0.000000e+00 : f32
    %207 = vector.shape_cast %28 : vector<1x256xi1> to vector<1x256xi1>
    %208 = vector.broadcast %207 : vector<1x256xi1> to vector<16x256xi1>
    %209 = vector.broadcast %cst_114 : f32 to vector<16x256xf32>
    %210 = arith.select %208, %206, %209 : vector<16x256xi1>, vector<16x256xf32>
    %c96 = arith.constant 96 : index
    %c0_115 = arith.constant 0 : index
    %211 = vector.load %arg10[%c96, %c0_115] : memref<144x256xf32, #tpu.memory_space<vmem>>, vector<16x256xf32>
    tpu.vector_store %arg10[%c96, %c0_115], %210 {strides = array<i32>} : memref<144x256xf32, #tpu.memory_space<vmem>>, vector<16x256xf32>,
    %c0_116 = arith.constant 0 : index
    %c144_117 = arith.constant 144 : index
    %212 = vector.load %arg9[%c0_116, %c144_117] : memref<16x512xf32, #tpu.memory_space<vmem>>, vector<16x256xf32>
    %c112_118 = arith.constant 112 : index
    %c0_119 = arith.constant 0 : index
    %213 = vector.load %arg10[%c112_118, %c0_119] : memref<144x256xf32, #tpu.memory_space<vmem>>, vector<16x256xf32>
    tpu.vector_store %arg10[%c112_118, %c0_119], %212 {strides = array<i32>} : memref<144x256xf32, #tpu.memory_space<vmem>>, vector<16x256xf32>,
    %c0_120 = arith.constant 0 : index
    %c145_121 = arith.constant 145 : index
    %214 = vector.load %arg9[%c0_120, %c145_121] : memref<16x512xf32, #tpu.memory_space<vmem>>, vector<16x256xf32>
    %cst_122 = arith.constant 0.000000e+00 : f32
    %215 = vector.shape_cast %26 : vector<1x256xi1> to vector<1x256xi1>
    %216 = vector.broadcast %215 : vector<1x256xi1> to vector<16x256xi1>
    %217 = vector.broadcast %cst_122 : f32 to vector<16x256xf32>
    %218 = arith.select %216, %214, %217 : vector<16x256xi1>, vector<16x256xf32>
    %c128_123 = arith.constant 128 : index
    %c0_124 = arith.constant 0 : index
    %219 = vector.load %arg10[%c128_123, %c0_124] : memref<144x256xf32, #tpu.memory_space<vmem>>, vector<16x256xf32>
    tpu.vector_store %arg10[%c128_123, %c0_124], %218 {strides = array<i32>} : memref<144x256xf32, #tpu.memory_space<vmem>>, vector<16x256xf32>,
    %c0_125 = arith.constant 0 : index
    %c0_126 = arith.constant 0 : index
    %220 = vector.load %arg10[%c0_125, %c0_126] : memref<144x256xf32, #tpu.memory_space<vmem>>, vector<144x256xf32>
    %221 = arith.truncf %220 : vector<144x256xf32> to vector<144x256xbf16>
    %c0_127 = arith.constant 0 : index
    %c0_128 = arith.constant 0 : index
    %222 = vector.load %arg6[%c0_127, %c0_128] : memref<8x144xbf16, #tpu.memory_space<vmem>>, vector<8x144xbf16>
    %cst_129 = arith.constant dense<0.000000e+00> : vector<8x256xf32>
    %223 = tpu.matmul %222, %221, %cst_129 {dimension_numbers = #tpu.dot_dimension_numbers<[1], [0], [0], [1], [0, 0, 1, 1], [], []>} : vector<8x144xbf16>, vector<144x256xbf16>, vector<8x256xf32> -> vector<8x256xf32>
    %c0_130 = arith.constant 0 : index
    %c0_131 = arith.constant 0 : index
    %224 = vector.load %arg7[%c0_130, %c0_131] : memref<8x1xf32, #tpu.memory_space<vmem>>, vector<8x1xf32>
    %225 = vector.broadcast %224 : vector<8x1xf32> to vector<8x256xf32>
    %226 = arith.addf %223, %225 : vector<8x256xf32>
    %227 = arith.addf %120, %226 : vector<8x256xf32>
    %c0_132 = arith.constant 0 : index
    %c0_133 = arith.constant 0 : index
    %c0_134 = arith.constant 0 : index
    %228 = vector.load %arg8[%c0_132, %c0_133, %c0_134] : memref<1x8x256xf32, #tpu.memory_space<vmem>>, vector<1x8x256xf32>
    %229 = vector.shape_cast %228 : vector<1x8x256xf32> to vector<8x256xf32>
    %230 = vector.shape_cast %227 : vector<8x256xf32> to vector<1x8x256xf32>
    tpu.vector_store %arg8[%c0_132, %c0_133, %c0_134], %230 {strides = array<i32>} : memref<1x8x256xf32, #tpu.memory_space<vmem>>, vector<1x8x256xf32>,
    return
  }
  func.func @transform_0(%arg0: i32) -> (i32, i32, i32) {
    %c0_i32 = arith.constant 0 : i32
    %c0_i32_0 = arith.constant 0 : i32
    %c0_i32_1 = arith.constant 0 : i32
    return %arg0, %c0_i32, %c0_i32_0 : i32, i32, i32
  }
  func.func @transform_1(%arg0: i32) -> (i32, i32) {
    %c0_i32 = arith.constant 0 : i32
    %c0_i32_0 = arith.constant 0 : i32
    %c0_i32_1 = arith.constant 0 : i32
    return %c0_i32, %c0_i32_0 : i32, i32
  }
  func.func @transform_2(%arg0: i32) -> (i32, i32) {
    %c0_i32 = arith.constant 0 : i32
    %c0_i32_0 = arith.constant 0 : i32
    %c0_i32_1 = arith.constant 0 : i32
    return %c0_i32, %c0_i32_0 : i32, i32
  }
  func.func @transform_3(%arg0: i32) -> (i32, i32) {
    %c0_i32 = arith.constant 0 : i32
    %c0_i32_0 = arith.constant 0 : i32
    %c0_i32_1 = arith.constant 0 : i32
    return %c0_i32, %c0_i32_0 : i32, i32
  }
  func.func @transform_4(%arg0: i32) -> (i32, i32) {
    %c0_i32 = arith.constant 0 : i32
    %c0_i32_0 = arith.constant 0 : i32
    %c0_i32_1 = arith.constant 0 : i32
    return %c0_i32, %c0_i32_0 : i32, i32
  }
  func.func @transform_5(%arg0: i32) -> (i32, i32) {
    %c0_i32 = arith.constant 0 : i32
    %c0_i32_0 = arith.constant 0 : i32
    %c0_i32_1 = arith.constant 0 : i32
    return %c0_i32, %c0_i32_0 : i32, i32
  }
  func.func @transform_6(%arg0: i32) -> (i32, i32) {
    %c0_i32 = arith.constant 0 : i32
    %c0_i32_0 = arith.constant 0 : i32
    %c0_i32_1 = arith.constant 0 : i32
    return %c0_i32, %c0_i32_0 : i32, i32
  }
  func.func @transform_7(%arg0: i32) -> (i32, i32, i32) {
    %c0_i32 = arith.constant 0 : i32
    %c0_i32_0 = arith.constant 0 : i32
    %c0_i32_1 = arith.constant 0 : i32
    return %arg0, %c0_i32, %c0_i32_0 : i32, i32, i32
  }
}

</mosaic_0001>

<llo_original>
// kernel: tpu_custom_call.1
$region0: #{tpu_custom_call.1}
  #allocation0 [shape = 'u32[]', space=smem, size = 0x4, offset = 0x4, fixed_abs, tag = 'smem constant byte address 0x4 - core index']
  #allocation1 [shape = 'u32[144,128]{1,0:T(1,128)}', space=vmem, size = 0x12000, scoped, tag = 'internal scratch']
  #allocation2 [shape = 'f32[16,512]{1,0:T(8,128)}', space=vmem, size = 0x8000, scoped, tag = 'scratch operand']
  #allocation3 [shape = 'f32[144,256]{1,0:T(8,128)}', space=vmem, size = 0x24000, scoped, tag = 'scratch operand']
  %s0 = inlined_call_operand.vmem [shape: f32[2,4,256], index: 0, kind: input, shape index: {}]
  %s1 = inlined_call_operand.vmem [shape: bf16[24,36], index: 1, kind: input, shape index: {}]
  %s2 = inlined_call_operand.vmem [shape: f32[24,1], index: 2, kind: input, shape index: {}]
  %s3 = inlined_call_operand.vmem [shape: bf16[16,16], index: 3, kind: input, shape index: {}]
  %s4 = inlined_call_operand.vmem [shape: f32[16,1], index: 4, kind: input, shape index: {}]
  %s5 = inlined_call_operand.vmem [shape: bf16[8,144], index: 5, kind: input, shape index: {}]
  %s6 = inlined_call_operand.vmem [shape: f32[8,1], index: 6, kind: input, shape index: {}]
  %s7 = inlined_call_operand.hbm [shape: f32[2,8,256], index: 7, kind: output, shape index: {}]
  %s8 = sld [smem:[#allocation0]]
  $region61: #{tpu_custom_call.1} parent=0
    _
  %s10 = ssub.s32 1, %s8
  %s11 = scalar_select 0, %s10, %s8
  $region1: #{tpu_custom_call.1} parent=0
    #allocation4 [shape = 'u8[16384]{0}', space=vmem, size = 0x4000, scoped, tag = 'output window, operand 0']
    #allocation5 [shape = 's32[2]{0}', space=sflag, size = 0x8, scoped, tag = 'scoped memory for tpu_custom_call.1']
    %12 = vsyncpa [#allocation5], 0
    %s13 = scalar_lea.sflag [#allocation5], 1
    %14 = vsyncpa %s13, 0
    loop: start=0, step=1, limit=4
    $region2: #{tpu_custom_call.1} parent=1 // loop_pre_header
      _
    $region3: #{tpu_custom_call.1} parent=1 // loop_header
      %s16 = sphi 0, %s20
      %p17 = scmp.ge.s32.totalorder %s16, 4
      %s26 = sphi 0, %s28
      %s29 = sphi 0, %s26
      %s30 = sphi 0, %s29
      %s46 = sphi 0, %s30
      %s50 = sphi 0, %s50
      %s52 = sphi 0, %s50
      %s53 = sphi 0, %s52
      %s67 = sphi 0, %s53
      %s71 = sphi 0, %s71
      %s73 = sphi 0, %s71
      %s74 = sphi 0, %s73
      %s88 = sphi 0, %s74
      %s92 = sphi 0, %s92
      %s94 = sphi 0, %s92
      %s95 = sphi 0, %s94
      %s109 = sphi 0, %s95
      %s113 = sphi 0, %s113
      %s115 = sphi 0, %s113
      %s116 = sphi 0, %s115
      %s130 = sphi 0, %s116
      %s134 = sphi 0, %s134
      %s136 = sphi 0, %s134
      %s137 = sphi 0, %s136
      %s151 = sphi 0, %s137
      %s155 = sphi 0, %s155
      %s157 = sphi 0, %s155
      %s158 = sphi 0, %s157
      %s172 = sphi 0, %s158
      %s178 = sphi 0, %s180
      %s181 = sphi 0, %s178
      %s182 = sphi 0, %s181
      %s198 = sphi 0, %s182
    $region4: #{tpu_custom_call.1} parent=1 // loop_header_branch
      %19 = sbr.rel (%p17) target = $region8
    $region5: #{tpu_custom_call.1} parent=1 // loop_body
      %s21 = ssub.s32 %s16, 1
      %s22 = ssub.s32 %s16, 2
      %s23 = sadd.s32 %s16, 1
      %s24 = ssub.s32 %s16, %s23
      %p25 = scmp.eq.s32.totalorder %s24, 0
      %s27 = sadd.s32 %s26, 1
      %s28 = scalar_select %p25, %s26, %s27
      %p31 = pneg %p25
      %p32 = scmp.eq.s32.totalorder %s16, 1
      %p33 = por %p31, %p32
      %p34 = scmp.ne.s32.totalorder %s26, %s29
      %p35 = scmp.eq.s32.totalorder %s16, 0
      %p36 = por %p34, %p35
      %p37 = scmp.ne.s32.totalorder %s26, %s29
      %p38 = scmp.eq.s32.totalorder %s21, 1
      %p39 = por %p37, %p38
      %p40 = scmp.ne.s32.totalorder %s29, %s30
      %p41 = scmp.eq.s32.totalorder %s21, 0
      %p42 = por %p40, %p41
      %p43 = scmp.ne.s32.totalorder %s29, %s30
      %p44 = scmp.eq.s32.totalorder %s22, 1
      %p45 = por %p43, %p44
      %p47 = scmp.ne.s32.totalorder %s30, %s46
      %p48 = scmp.eq.s32.totalorder %s22, 0
      %p49 = por %p47, %p48
      %s51 = sadd.s32 %s50, 1
      %p54 = scmp.eq.s32.totalorder %s16, 1
      %p55 = scmp.ne.s32.totalorder %s50, %s52
      %p56 = scmp.eq.s32.totalorder %s16, 0
      %p57 = por %p55, %p56
      %p58 = scmp.ne.s32.totalorder %s50, %s52
      %p59 = scmp.eq.s32.totalorder %s21, 1
      %p60 = por %p58, %p59
      %p61 = scmp.ne.s32.totalorder %s52, %s53
      %p62 = scmp.eq.s32.totalorder %s21, 0
      %p63 = por %p61, %p62
      %p64 = scmp.ne.s32.totalorder %s52, %s53
      %p65 = scmp.eq.s32.totalorder %s22, 1
      %p66 = por %p64, %p65
      %p68 = scmp.ne.s32.totalorder %s53, %s67
      %p69 = scmp.eq.s32.totalorder %s22, 0
      %p70 = por %p68, %p69
      %s72 = sadd.s32 %s71, 1
      %p75 = scmp.eq.s32.totalorder %s16, 1
      %p76 = scmp.ne.s32.totalorder %s71, %s73
      %p77 = scmp.eq.s32.totalorder %s16, 0
      %p78 = por %p76, %p77
      %p79 = scmp.ne.s32.totalorder %s71, %s73
      %p80 = scmp.eq.s32.totalorder %s21, 1
      %p81 = por %p79, %p80
      %p82 = scmp.ne.s32.totalorder %s73, %s74
      %p83 = scmp.eq.s32.totalorder %s21, 0
      %p84 = por %p82, %p83
      %p85 = scmp.ne.s32.totalorder %s73, %s74
      %p86 = scmp.eq.s32.totalorder %s22, 1
      %p87 = por %p85, %p86
      %p89 = scmp.ne.s32.totalorder %s74, %s88
      %p90 = scmp.eq.s32.totalorder %s22, 0
      %p91 = por %p89, %p90
      %s93 = sadd.s32 %s92, 1
      %p96 = scmp.eq.s32.totalorder %s16, 1
      %p97 = scmp.ne.s32.totalorder %s92, %s94
      %p98 = scmp.eq.s32.totalorder %s16, 0
      %p99 = por %p97, %p98
      %p100 = scmp.ne.s32.totalorder %s92, %s94
      %p101 = scmp.eq.s32.totalorder %s21, 1
      %p102 = por %p100, %p101
      %p103 = scmp.ne.s32.totalorder %s94, %s95
      %p104 = scmp.eq.s32.totalorder %s21, 0
      %p105 = por %p103, %p104
      %p106 = scmp.ne.s32.totalorder %s94, %s95
      %p107 = scmp.eq.s32.totalorder %s22, 1
      %p108 = por %p106, %p107
      %p110 = scmp.ne.s32.totalorder %s95, %s109
      %p111 = scmp.eq.s32.totalorder %s22, 0
      %p112 = por %p110, %p111
      %s114 = sadd.s32 %s113, 1
      %p117 = scmp.eq.s32.totalorder %s16, 1
      %p118 = scmp.ne.s32.totalorder %s113, %s115
      %p119 = scmp.eq.s32.totalorder %s16, 0
      %p120 = por %p118, %p119
      %p121 = scmp.ne.s32.totalorder %s113, %s115
      %p122 = scmp.eq.s32.totalorder %s21, 1
      %p123 = por %p121, %p122
      %p124 = scmp.ne.s32.totalorder %s115, %s116
      %p125 = scmp.eq.s32.totalorder %s21, 0
      %p126 = por %p124, %p125
      %p127 = scmp.ne.s32.totalorder %s115, %s116
      %p128 = scmp.eq.s32.totalorder %s22, 1
      %p129 = por %p127, %p128
      %p131 = scmp.ne.s32.totalorder %s116, %s130
      %p132 = scmp.eq.s32.totalorder %s22, 0
      %p133 = por %p131, %p132
      %s135 = sadd.s32 %s134, 1
      %p138 = scmp.eq.s32.totalorder %s16, 1
      %p139 = scmp.ne.s32.totalorder %s134, %s136
      %p140 = scmp.eq.s32.totalorder %s16, 0
      %p141 = por %p139, %p140
      %p142 = scmp.ne.s32.totalorder %s134, %s136
      %p143 = scmp.eq.s32.totalorder %s21, 1
      %p144 = por %p142, %p143
      %p145 = scmp.ne.s32.totalorder %s136, %s137
      %p146 = scmp.eq.s32.totalorder %s21, 0
      %p147 = por %p145, %p146
      %p148 = scmp.ne.s32.totalorder %s136, %s137
      %p149 = scmp.eq.s32.totalorder %s22, 1
      %p150 = por %p148, %p149
      %p152 = scmp.ne.s32.totalorder %s137, %s151
      %p153 = scmp.eq.s32.totalorder %s22, 0
      %p154 = por %p152, %p153
      %s156 = sadd.s32 %s155, 1
      %p159 = scmp.eq.s32.totalorder %s16, 1
      %p160 = scmp.ne.s32.totalorder %s155, %s157
      %p161 = scmp.eq.s32.totalorder %s16, 0
      %p162 = por %p160, %p161
      %p163 = scmp.ne.s32.totalorder %s155, %s157
      %p164 = scmp.eq.s32.totalorder %s21, 1
      %p165 = por %p163, %p164
      %p166 = scmp.ne.s32.totalorder %s157, %s158
      %p167 = scmp.eq.s32.totalorder %s21, 0
      %p168 = por %p166, %p167
      %p169 = scmp.ne.s32.totalorder %s157, %s158
      %p170 = scmp.eq.s32.totalorder %s22, 1
      %p171 = por %p169, %p170
      %p173 = scmp.ne.s32.totalorder %s158, %s172
      %p174 = scmp.eq.s32.totalorder %s22, 0
      %p175 = por %p173, %p174
      %s176 = ssub.s32 %s16, %s23
      %p177 = scmp.eq.s32.totalorder %s176, 0
      %s179 = sadd.s32 %s178, 1
      %s180 = scalar_select %p177, %s178, %s179
      %p183 = pneg %p177
      %p184 = scmp.eq.s32.totalorder %s16, 1
      %p185 = por %p183, %p184
      %p186 = scmp.ne.s32.totalorder %s178, %s181
      %p187 = scmp.eq.s32.totalorder %s16, 0
      %p188 = por %p186, %p187
      %p189 = scmp.ne.s32.totalorder %s178, %s181
      %p190 = scmp.eq.s32.totalorder %s21, 1
      %p191 = por %p189, %p190
      %p192 = scmp.ne.s32.totalorder %s181, %s182
      %p193 = scmp.eq.s32.totalorder %s21, 0
      %p194 = por %p192, %p193
      %p195 = scmp.ne.s32.totalorder %s181, %s182
      %p196 = scmp.eq.s32.totalorder %s22, 1
      %p197 = por %p195, %p196
      %p199 = scmp.ne.s32.totalorder %s182, %s198
      %p200 = scmp.eq.s32.totalorder %s22, 0
      %p201 = por %p199, %p200
      %p202 = scmp.le.s32.totalorder 1, %s16
      %p203 = scmp.lt.s32.totalorder %s16, 3
      %p204 = pnand %p202, %p203
      %p205 = pneg %p204
      // Predicated region
      $region9: #{tpu_custom_call.1} parent=5 // pred_check
        _
      $region10: #{tpu_custom_call.1} parent=5 // pred_check_branch
        %207 = sbr.rel (%p204) target = $region12
      $region11: #{tpu_custom_call.1} parent=5 // pred_region
        %s208 = ssub.s32 %s16, 1
        // Predicated region
        $region13: #{tpu_custom_call.1} parent=11 // pred_check
          %p209 = pneg %p63
        $region14: #{tpu_custom_call.1} parent=11 // pred_check_branch
          %211 = sbr.rel (%p209) target = $region16
        $region15: #{tpu_custom_call.1} parent=11 // pred_region
          _
        $region16: #{tpu_custom_call.1} parent=11 // pred_fallthru
          _
        // Predicated region
        $region17: #{tpu_custom_call.1} parent=11 // pred_check
          %p212 = pneg %p84
        $region18: #{tpu_custom_call.1} parent=11 // pred_check_branch
          %214 = sbr.rel (%p212) target = $region20
        $region19: #{tpu_custom_call.1} parent=11 // pred_region
          _
        $region20: #{tpu_custom_call.1} parent=11 // pred_fallthru
          _
        // Predicated region
        $region21: #{tpu_custom_call.1} parent=11 // pred_check
          %p215 = pneg %p105
        $region22: #{tpu_custom_call.1} parent=11 // pred_check_branch
          %217 = sbr.rel (%p215) target = $region24
        $region23: #{tpu_custom_call.1} parent=11 // pred_region
          _
        $region24: #{tpu_custom_call.1} parent=11 // pred_fallthru
          _
        // Predicated region
        $region25: #{tpu_custom_call.1} parent=11 // pred_check
          %p218 = pneg %p126
        $region26: #{tpu_custom_call.1} parent=11 // pred_check_branch
          %220 = sbr.rel (%p218) target = $region28
        $region27: #{tpu_custom_call.1} parent=11 // pred_region
          _
        $region28: #{tpu_custom_call.1} parent=11 // pred_fallthru
          _
        // Predicated region
        $region29: #{tpu_custom_call.1} parent=11 // pred_check
          %p221 = pneg %p147
        $region30: #{tpu_custom_call.1} parent=11 // pred_check_branch
          %223 = sbr.rel (%p221) target = $region32
        $region31: #{tpu_custom_call.1} parent=11 // pred_region
          _
        $region32: #{tpu_custom_call.1} parent=11 // pred_fallthru
          _
        // Predicated region
        $region33: #{tpu_custom_call.1} parent=11 // pred_check
          %p224 = pneg %p168
        $region34: #{tpu_custom_call.1} parent=11 // pred_check_branch
          %226 = sbr.rel (%p224) target = $region36
        $region35: #{tpu_custom_call.1} parent=11 // pred_region
          _
        $region36: #{tpu_custom_call.1} parent=11 // pred_fallthru
          _
      $region12: #{tpu_custom_call.1} parent=5 // pred_fallthru
        _
      %p227 = scmp.lt.s32.totalorder %s16, 2
      // Predicated region
      $region37: #{tpu_custom_call.1} parent=5 // pred_check
        %p228 = pneg %p227
      $region38: #{tpu_custom_call.1} parent=5 // pred_check_branch
        %230 = sbr.rel (%p228) target = $region40
      $region39: #{tpu_custom_call.1} parent=5 // pred_region
        // Predicated region
        $region41: #{tpu_custom_call.1} parent=39 // pred_check
          %p231 = pneg %p36
        $region42: #{tpu_custom_call.1} parent=39 // pred_check_branch
          %233 = sbr.rel (%p231) target = $region44
        $region43: #{tpu_custom_call.1} parent=39 // pred_region
          %p234 = scmp.lt.s32.totalorder %s16, 1
          %s235 = scalar_select %p234, %s16, 1
          %s236 = smul.addr %s235, 2
          %s237 = smul.addr %s236, 4
          %s238 = scalar_lea.vmem %s0, %s237
        $region44: #{tpu_custom_call.1} parent=39 // pred_fallthru
          _
      $region40: #{tpu_custom_call.1} parent=5 // pred_fallthru
        _
      %p239 = scmp.le.s32.totalorder 1, %s16
      %p240 = scmp.lt.s32.totalorder %s16, 3
      %p241 = pnand %p239, %p240
      %p242 = pneg %p241
      // Predicated region
      $region45: #{tpu_custom_call.1} parent=5 // pred_check
        _
      $region46: #{tpu_custom_call.1} parent=5 // pred_check_branch
        %244 = sbr.rel (%p241) target = $region48
      $region47: #{tpu_custom_call.1} parent=5 // pred_region
        %s245 = ssub.s32 %s16, 1
        %p246 = scmp.lt.s32.totalorder %s21, 1
        %s247 = scalar_select %p246, %s21, 1
        %s248 = smul.addr %s247, 2
        %s249 = smul.addr %s248, 4
        %s250 = scalar_lea.vmem %s0, %s249
        %p251 = pneg %p42
        %p252 = pneg %p39
        %p253 = pneg %p63
        %p254 = pneg %p60
        %p255 = pneg %p84
        %p256 = pneg %p81
        %p257 = pneg %p105
        %p258 = pneg %p102
        %p259 = pneg %p126
        %p260 = pneg %p123
        %p261 = pneg %p147
        %p262 = pneg %p144
        %p263 = pneg %p168
        %p264 = pneg %p165
        %p265 = pneg %p194
        %p266 = pneg %p191
        %s267 = sand.u32 %s181, 1
        %s268 = scalar_lea.sflag [#allocation5], %s267
        %s269 = sand.u32 %s181, 1
        %s270 = smul.addr %s269, 16
        %s271 = scalar_lea.vmem [#allocation4], %s270
        %p272 = scmp.lt.s32.totalorder %s21, 1
        %s273 = scalar_select %p272, %s21, 1
        %s274 = smul.addr %s273, 2
        %s275 = smul.addr %s274, 4
        %s276 = scalar_lea.vmem %s0, %s275
        %278 = vst [vmem:[#allocation2] sm:$0xff] 0.0
        %279 = vst [vmem:[#allocation2 + $0x20] sm:$0xff] 0.0
        %280 = vst [vmem:[#allocation2 + $0x18] sm:$0xff] 0.0
        %281 = vst [vmem:[#allocation2 + $0x38] sm:$0xff] 0.0
        %v282 = vld [vmem:[%s276] sm:$0xff]
        %v283 = vlaneseq
        %v284 = vand.u32 %v283, 127
        %v285 = vadd.s32 %v284, 128
        %vm286 = vcmp.lt.s32.totalorder %v284, 0
        %v287 = vsub.s32 0, %v284
        %v288 = vsel %vm286, %v287, %v284
        %v289 = vshrl.u32 %v288, 4
        %v290 = vand.u32 %v288, 15
        %v291 = vsub.s32 0, %v290
        %v292 = vsel %vm286, %v291, %v290
        %vm293 = vcmp.lt.s32.totalorder %v285, 0
        %v294 = vsub.s32 0, %v285
        %v295 = vsel %vm293, %v294, %v285
        %v296 = vshrl.u32 %v295, 4
        %v297 = vand.u32 %v295, 15
        %v298 = vsub.s32 0, %v297
        %v299 = vsel %vm293, %v298, %v297
        %vm300 = vcmp.ne.s32.totalorder %v292, 0
        %vm301 = vcmp.ne.s32.totalorder %v299, 0
        %vm302 = vcmp.lt.s32.totalorder %v292, 0
        %vm303 = vcmp.lt.s32.totalorder %v299, 0
        %vm304 = vmand %vm302, %vm300
        %vm305 = vmand %vm303, %vm301
        %v306 = vadd.s32 %v292, 16
        %v307 = vadd.s32 %v299, 16
        %v308 = vsel %vm304, %v306, %v292
        %v309 = vsel %vm305, %v307, %v299
        %v310 = vadd.s32 %v308, 1
        %v311 = vadd.s32 %v309, 1
        %vm312 = vcmp.lt.s32.totalorder %v310, 16
        %vm313 = vcmp.lt.s32.totalorder %v311, 16
        %vm314 = vcmp.ge.s32.totalorder %v308, 1
        %vm315 = vcmp.ge.s32.totalorder %v309, 1
        %v317 = vcombine.high %v282, %v282
        %319 = vst [vmem:[#allocation2 + $0x8] sm:$0xf] %v282
        %320 = vst [vmem:[#allocation2 + $0x10] sm:$0xf] %v317
        %v321 = vld [vmem:[#allocation2 + $0x8] sm:$0xf]
        %v322 = vld [vmem:[#allocation2 + $0x10] sm:$0xf]
        %v323 = vadd.f32 %v321, 0.0
        %v324 = vadd.f32 %v322, 0.0
        %v325 = vmul.f32 %v321, %v321
        %v326 = vmul.f32 %v322, %v322
        %v327 = vadd.f32 %v325, 0.0
        %v328 = vadd.f32 %v326, 0.0
        %v329 = vld [vmem:[#allocation2 + $0x18] sm:$0xf]
        %v330 = vsel %vm312, 1, 0
        %v331 = vsel %vm313, 1, 0
        %vm332 = vcmp.eq.s32.totalorder %v330, 1
        %vm333 = vcmp.eq.s32.totalorder %v331, 1
        %337 = vrot.lane.b32.xlu0 %v321, 127
        %v338 = vpop.permute.xlu0 %337
        %339 = vrot.lane.b32.xlu0 %v322, 127
        %v340 = vpop.permute.xlu0 %339
        %341 = vrot.lane.b32.xlu0 %v329, 127
        %v342 = vpop.permute.xlu0 %341
        %vm343 = vcmask 1039360
        %v344 = vsel %vm343, %v338, %v340
        %v345 = vsel %vm343, %v340, %v342
        %v348 = vsel %vm332, %v344, 0.0
        %v349 = vsel %vm333, %v345, 0.0
        %v350 = vadd.f32 %v323, %v348
        %v351 = vadd.f32 %v324, %v349
        %v352 = vmul.f32 %v348, %v348
        %v353 = vmul.f32 %v349, %v349
        %v354 = vadd.f32 %v327, %v352
        %v355 = vadd.f32 %v328, %v353
        %356 = vrot.lane.b32.xlu0 %v321, 112
        %v357 = vpop.permute.xlu0 %356
        %358 = vrot.lane.b32.xlu0 %v322, 112
        %v359 = vpop.permute.xlu0 %358
        %360 = vrot.lane.b32.xlu0 %v329, 112
        %v361 = vpop.permute.xlu0 %360
        %vm362 = vcmask 916480
        %v363 = vsel %vm362, %v357, %v359
        %v364 = vsel %vm362, %v359, %v361
        %v367 = vadd.f32 %v350, %v363
        %v368 = vadd.f32 %v351, %v364
        %v369 = vmul.f32 %v329, %v329
        %373 = vrot.lane.b32.xlu0 %v325, 112
        %v374 = vpop.permute.xlu0 %373
        %375 = vrot.lane.b32.xlu0 %v326, 112
        %v376 = vpop.permute.xlu0 %375
        %377 = vrot.lane.b32.xlu0 %v369, 112
        %v378 = vpop.permute.xlu0 %377
        %v379 = vsel %vm362, %v374, %v376
        %v380 = vsel %vm362, %v376, %v378
        %v383 = vadd.f32 %v354, %v379
        %v384 = vadd.f32 %v355, %v380
        %385 = vrot.lane.b32.xlu0 %v321, 111
        %v386 = vpop.permute.xlu0 %385
        %387 = vrot.lane.b32.xlu0 %v322, 111
        %v388 = vpop.permute.xlu0 %387
        %389 = vrot.lane.b32.xlu0 %v329, 111
        %v390 = vpop.permute.xlu0 %389
        %vm391 = vcmask 908288
        %v392 = vsel %vm391, %v386, %v388
        %v393 = vsel %vm391, %v388, %v390
        %v396 = vsel %vm332, %v392, 0.0
        %v397 = vsel %vm333, %v393, 0.0
        %v398 = vadd.f32 %v367, %v396
        %v399 = vadd.f32 %v368, %v397
        %v400 = vmul.f32 %v396, %v396
        %v401 = vmul.f32 %v397, %v397
        %v402 = vadd.f32 %v383, %v400
        %v403 = vadd.f32 %v384, %v401
        %v404 = vrcp.pop 4.0
        %v405 = vmul.f32 %v398, %v404
        %v406 = vmul.f32 %v399, %v404
        %v407 = vmul.f32 %v402, %v404
        %v408 = vmul.f32 %v403, %v404
        %v409 = vmul.f32 %v405, %v405
        %v410 = vmul.f32 %v406, %v406
        %v411 = vsub.f32 %v407, %v409
        %v412 = vsub.f32 %v408, %v410
        %v413 = vmax.f32 %v411, 0.0
        %v414 = vmax.f32 %v412, 0.0
        %v417 = vcombine.low %v405, %v406
        %v419 = vsub.f32 %v282, %v417
        %v420 = vadd.f32 %v413, 1e-05
        %v421 = vadd.f32 %v414, 1e-05
        %v422 = vrsqrt.pop %v420
        %v423 = vrsqrt.pop %v421
        %v426 = vcombine.low %v422, %v423
        %v428 = vmul.f32 %v419, %v426
        %v430 = vcombine.high %v428, %v428
        %432 = vst [vmem:[#allocation2 + $0x8] sm:$0xf] %v428
        %433 = vst [vmem:[#allocation2 + $0x10] sm:$0xf] %v430
        %v434 = vld [vmem:[#allocation2] sm:$0xf]
        %v435 = vld [vmem:[#allocation2 + $0x8] sm:$0xf]
        %v436 = vld [vmem:[#allocation2 + $0x10] sm:$0xf]
        %v437 = vsel %vm314, 1, 0
        %v438 = vsel %vm315, 1, 0
        %vm439 = vcmp.eq.s32.totalorder %v437, 1
        %vm440 = vcmp.eq.s32.totalorder %v438, 1
        %444 = vrot.lane.b32.xlu0 %v434, 17
        %v445 = vpop.permute.xlu0 %444
        %446 = vrot.lane.b32.xlu0 %v435, 17
        %v447 = vpop.permute.xlu0 %446
        %448 = vrot.lane.b32.xlu0 %v436, 17
        %v449 = vpop.permute.xlu0 %448
        %vm450 = vcmask 138240
        %v451 = vsel %vm450, %v445, %v447
        %v452 = vsel %vm450, %v447, %v449
        %v455 = vsel %vm439, %v451, 0.0
        %v456 = vsel %vm440, %v452, 0.0
        %457 = vst [vmem:[#allocation3] sm:$0xf] %v455
        %458 = vst [vmem:[#allocation3 + $0x8] sm:$0xf] %v456
        %v459 = vld [vmem:[#allocation2] sm:$0xf]
        %v460 = vld [vmem:[#allocation2 + $0x8] sm:$0xf]
        %v461 = vld [vmem:[#allocation2 + $0x10] sm:$0xf]
        %v465 = vrot.slane %v459, 4
        %v466 = vrot.slane %v460, 4
        %v467 = vrot.slane %v461, 4
        %468 = vrot.lane.b32.xlu0 %v465, 16
        %v469 = vpop.permute.xlu0 %468
        %470 = vrot.lane.b32.xlu0 %v466, 16
        %v471 = vpop.permute.xlu0 %470
        %472 = vrot.lane.b32.xlu0 %v467, 16
        %v473 = vpop.permute.xlu0 %472
        %vm474 = vcmask 130048
        %v475 = vsel %vm474, %v469, %v471
        %v476 = vsel %vm474, %v471, %v473
        %479 = vst [vmem:[#allocation3] sm:$0xf0] %v475
        %480 = vst [vmem:[#allocation3 + $0x8] sm:$0xf0] %v476
        %v481 = vld [vmem:[#allocation2] sm:$0xf]
        %v482 = vld [vmem:[#allocation2 + $0x8] sm:$0xf]
        %v483 = vld [vmem:[#allocation2 + $0x10] sm:$0xf]
        %487 = vrot.lane.b32.xlu0 %v481, 15
        %v488 = vpop.permute.xlu0 %487
        %489 = vrot.lane.b32.xlu0 %v482, 15
        %v490 = vpop.permute.xlu0 %489
        %491 = vrot.lane.b32.xlu0 %v483, 15
        %v492 = vpop.permute.xlu0 %491
        %vm493 = vcmask 121856
        %v494 = vsel %vm493, %v488, %v490
        %v495 = vsel %vm493, %v490, %v492
        %v498 = vsel %vm332, %v494, 0.0
        %v499 = vsel %vm333, %v495, 0.0
        %500 = vst [vmem:[#allocation3 + $0x10] sm:$0xf] %v498
        %501 = vst [vmem:[#allocation3 + $0x18] sm:$0xf] %v499
        %v502 = vld [vmem:[#allocation2] sm:$0xf]
        %v503 = vld [vmem:[#allocation2 + $0x8] sm:$0xf]
        %v504 = vld [vmem:[#allocation2 + $0x10] sm:$0xf]
        %508 = vrot.lane.b32.xlu0 %v502, 1
        %v509 = vpop.permute.xlu0 %508
        %510 = vrot.lane.b32.xlu0 %v503, 1
        %v511 = vpop.permute.xlu0 %510
        %512 = vrot.lane.b32.xlu0 %v504, 1
        %v513 = vpop.permute.xlu0 %512
        %vm514 = vcmask 7168
        %v515 = vsel %vm514, %v509, %v511
        %v516 = vsel %vm514, %v511, %v513
        %v519 = vsel %vm439, %v515, 0.0
        %v520 = vsel %vm440, %v516, 0.0
        %v523 = vrot.slane %v519, 4
        %v524 = vrot.slane %v520, 4
        %527 = vst [vmem:[#allocation3 + $0x10] sm:$0xf0] %v523
        %528 = vst [vmem:[#allocation3 + $0x18] sm:$0xf0] %v524
        %v529 = vld [vmem:[#allocation2 + $0x8] sm:$0xf]
        %v530 = vld [vmem:[#allocation2 + $0x10] sm:$0xf]
        %531 = vst [vmem:[#allocation3 + $0x20] sm:$0xf] %v529
        %532 = vst [vmem:[#allocation3 + $0x28] sm:$0xf] %v530
        %v533 = vld [vmem:[#allocation2 + $0x8] sm:$0xf]
        %v534 = vld [vmem:[#allocation2 + $0x10] sm:$0xf]
        %v535 = vld [vmem:[#allocation2 + $0x18] sm:$0xf]
        %539 = vrot.lane.b32.xlu0 %v533, 127
        %v540 = vpop.permute.xlu0 %539
        %541 = vrot.lane.b32.xlu0 %v534, 127
        %v542 = vpop.permute.xlu0 %541
        %543 = vrot.lane.b32.xlu0 %v535, 127
        %v544 = vpop.permute.xlu0 %543
        %v545 = vsel %vm343, %v540, %v542
        %v546 = vsel %vm343, %v542, %v544
        %v549 = vsel %vm332, %v545, 0.0
        %v550 = vsel %vm333, %v546, 0.0
        %v553 = vrot.slane %v549, 4
        %v554 = vrot.slane %v550, 4
        %557 = vst [vmem:[#allocation3 + $0x20] sm:$0xf0] %v553
        %558 = vst [vmem:[#allocation3 + $0x28] sm:$0xf0] %v554
        %v559 = vld [vmem:[#allocation2 + $0x8] sm:$0xf]
        %v560 = vld [vmem:[#allocation2 + $0x10] sm:$0xf]
        %v561 = vld [vmem:[#allocation2 + $0x18] sm:$0xf]
        %565 = vrot.lane.b32.xlu0 %v559, 113
        %v566 = vpop.permute.xlu0 %565
        %567 = vrot.lane.b32.xlu0 %v560, 113
        %v568 = vpop.permute.xlu0 %567
        %569 = vrot.lane.b32.xlu0 %v561, 113
        %v570 = vpop.permute.xlu0 %569
        %vm571 = vcmask 924672
        %v572 = vsel %vm571, %v566, %v568
        %v573 = vsel %vm571, %v568, %v570
        %v576 = vsel %vm439, %v572, 0.0
        %v577 = vsel %vm440, %v573, 0.0
        %578 = vst [vmem:[#allocation3 + $0x30] sm:$0xf] %v576
        %579 = vst [vmem:[#allocation3 + $0x38] sm:$0xf] %v577
        %v580 = vld [vmem:[#allocation2 + $0x8] sm:$0xf]
        %v581 = vld [vmem:[#allocation2 + $0x10] sm:$0xf]
        %v582 = vld [vmem:[#allocation2 + $0x18] sm:$0xf]
        %v586 = vrot.slane %v580, 4
        %v587 = vrot.slane %v581, 4
        %v588 = vrot.slane %v582, 4
        %589 = vrot.lane.b32.xlu0 %v586, 112
        %v590 = vpop.permute.xlu0 %589
        %591 = vrot.lane.b32.xlu0 %v587, 112
        %v592 = vpop.permute.xlu0 %591
        %593 = vrot.lane.b32.xlu0 %v588, 112
        %v594 = vpop.permute.xlu0 %593
        %v595 = vsel %vm362, %v590, %v592
        %v596 = vsel %vm362, %v592, %v594
        %599 = vst [vmem:[#allocation3 + $0x30] sm:$0xf0] %v595
        %600 = vst [vmem:[#allocation3 + $0x38] sm:$0xf0] %v596
        %v601 = vld [vmem:[#allocation2 + $0x8] sm:$0xf]
        %v602 = vld [vmem:[#allocation2 + $0x10] sm:$0xf]
        %v603 = vld [vmem:[#allocation2 + $0x18] sm:$0xf]
        %607 = vrot.lane.b32.xlu0 %v601, 111
        %v608 = vpop.permute.xlu0 %607
        %609 = vrot.lane.b32.xlu0 %v602, 111
        %v610 = vpop.permute.xlu0 %609
        %611 = vrot.lane.b32.xlu0 %v603, 111
        %v612 = vpop.permute.xlu0 %611
        %v613 = vsel %vm391, %v608, %v610
        %v614 = vsel %vm391, %v610, %v612
        %v617 = vsel %vm332, %v613, 0.0
        %v618 = vsel %vm333, %v614, 0.0
        %619 = vst [vmem:[#allocation3 + $0x40] sm:$0xf] %v617
        %620 = vst [vmem:[#allocation3 + $0x48] sm:$0xf] %v618
        %v621 = vld [vmem:[#allocation3] sm:$0xff]
        %v622 = vld [vmem:[#allocation3 + $0x8] sm:$0xff]
        %v623 = vld [vmem:[#allocation3 + $0x10] sm:$0xff]
        %v624 = vld [vmem:[#allocation3 + $0x18] sm:$0xff]
        %v625 = vld [vmem:[#allocation3 + $0x20] sm:$0xff]
        %v626 = vld [vmem:[#allocation3 + $0x28] sm:$0xff]
        %v627 = vld [vmem:[#allocation3 + $0x30] sm:$0xff]
        %v628 = vld [vmem:[#allocation3 + $0x38] sm:$0xff]
        %v629 = vld [vmem:[#allocation3 + $0x40] sm:$0xf]
        %v630 = vld [vmem:[#allocation3 + $0x48] sm:$0xf]
        %v631 = vpack.c.bf16 %v623, %v621
        %v632 = vpack.c.bf16 %v624, %v622
        %v633 = vpack.c.bf16 %v627, %v625
        %v634 = vpack.c.bf16 %v628, %v626
        %v635 = vpack.c.bf16 %v629, %v629
        %v636 = vpack.c.bf16 %v630, %v630
        %v637 = vld [vmem:[%s1] sm:$0xf]
        %v638 = vld [vmem:[%s1 + $0x4] sm:$0xf]
        %v639 = vld [vmem:[%s1 + $0x8] sm:$0xf]
        %v640 = vld [vmem:[%s2] sm:$0xff]
        %v641 = vld [vmem:[%s2 + $0x8] sm:$0xff]
        %v642 = vld [vmem:[%s2 + $0x10] sm:$0xff]
        %644 = vset.pattern.permute.xlu0 0
        %645 = vperm.xlu0 %644, %v640
        %v646 = vpop.permute.xlu0 %645
        %649 = vset.pattern.permute.xlu0 0
        %650 = vperm.xlu0 %649, %v641
        %v651 = vpop.permute.xlu0 %650
        %654 = vset.pattern.permute.xlu0 0
        %655 = vperm.xlu0 %654, %v642
        %v656 = vpop.permute.xlu0 %655
        %v661 = vunpack.c.l.b16 %v637
        %v662 = vunpack.c.l.b16 %v638
        %v663 = vunpack.c.l.b16 %v639
        %v664 = vpack.c.b16 %v662, %v661
        %v665 = vpack.c.b16 %v663, %v663
        %vm666 = vcmask 293888
        %v668 = vsel %vm666, %v664, 0
        %v671 = vsel %vm666, %v665, 0
        %vm673 = vcmask 1041408
        %v675 = vsel %vm673, %v635, 0
        %v678 = vsel %vm673, %v636, 0
        %680 = vmatprep.subr.bf16.mxu0 %v632
        %681 = vmatpush1.bf16.msra.mxu0 %v631
        %682 = vmatprep.subr.bf16.mxu0 %v634
        %683 = vmatpush1.bf16.msra.mxu0 %v633
        %684 = vmatprep.subr.bf16.mxu0 %v678
        %685 = vmatpush1.bf16.msra.mxu0 %v675
        %686 = vmatprep.subr.bf16.mxu0 0
        %687 = vmatpush1.bf16.msra.mxu0 0
        %688 = vmatprep.subr.bf16.mxu0 0
        %689 = vmatpush1.bf16.msra.mxu0 0
        %690 = vmatprep.subr.bf16.mxu0 0
        %691 = vmatpush1.bf16.msra.mxu0 0
        %692 = vmatprep.subr.bf16.mxu0 0
        %693 = vmatpush1.bf16.msra.mxu0 0
        %694 = vmatprep.subr.bf16.mxu0 0
        %695 = vmatpush1.bf16.msra.mxu0 0
        %696 = vmatprep.subr.bf16.mxu0 0
        %697 = vmatpush1.bf16.msra.mxu0 0
        %698 = vmatprep.subr.bf16.mxu0 0
        %699 = vmatpush1.bf16.msra.mxu0 0
        %700 = vmatprep.subr.bf16.mxu0 0
        %701 = vmatpush1.bf16.msra.mxu0 0
        %702 = vmatprep.subr.bf16.mxu0 0
        %703 = vmatpush1.bf16.msra.mxu0 0
        %704 = vmatprep.subr.bf16.mxu0 0
        %705 = vmatpush1.bf16.msra.mxu0 0
        %706 = vmatprep.subr.bf16.mxu0 0
        %707 = vmatpush1.bf16.msra.mxu0 0
        %708 = vmatprep.subr.bf16.mxu0 0
        %709 = vmatpush1.bf16.msra.mxu0 0
        %710 = vmatprep.subr.bf16.mxu0 0
        %711 = vmatpush1.bf16.msra.mxu0 0
        %712 = vmatprep.mubr.bf16.mxu0 0
        %713 = vmatmul.mubr.bf16.gmra.mrb[0].mxu0 %v668
        %v714 = vpop.f32.mrb[0].mxu0
        %v715 = vadd.f32 %v646, %v714
        %v716 = vpop.f32.mrb[0].mxu0
        %v717 = vadd.f32 %v646, %v716
        %v718 = vpop.f32.mrb[0].mxu0
        %v719 = vadd.f32 %v651, %v718
        %v720 = vpop.f32.mrb[0].mxu0
        %v721 = vadd.f32 %v651, %v720
        %722 = vmatprep.mubr.bf16.mxu0 0
        %723 = vmatmul.mubr.bf16.gmra.mrb[0].mxu0 %v671
        %v724 = vpop.f32.mrb[0].mxu0
        %v725 = vadd.f32 %v656, %v724
        %v726 = vpop.f32.mrb[0].mxu0
        %v727 = vadd.f32 %v656, %v726
        %v728 = vpop.f32.mrb[0].mxu0
        %v729 = vpop.f32.mrb[0].mxu0
        %730 = vdwg.mxu0
        %v731 = vadd.f32 %v715, %v717
        %v732 = vadd.f32 %v731, %v719
        %v733 = vadd.f32 %v732, %v721
        %734 = vadd.xlane.f32.xlu0 %v733
        %v735 = vpop.xlane.xlu0 %734
        %v736 = vrot.slane %v735, 4
        %v737 = vadd.f32 %v735, %v736
        %v738 = vrot.slane %v737, 2
        %v739 = vadd.f32 %v737, %v738
        %v740 = vrot.slane %v739, 1
        %v741 = vadd.f32 %v739, %v740
        %s742 = vtos %v741
        %v743 = vmul.f32 %v715, %v715
        %v744 = vmul.f32 %v717, %v717
        %v745 = vmul.f32 %v719, %v719
        %v746 = vmul.f32 %v721, %v721
        %v747 = vadd.f32 %v743, %v744
        %v748 = vadd.f32 %v747, %v745
        %v749 = vadd.f32 %v748, %v746
        %750 = vadd.xlane.f32.xlu0 %v749
        %v751 = vpop.xlane.xlu0 %750
        %v752 = vrot.slane %v751, 4
        %v753 = vadd.f32 %v751, %v752
        %v754 = vrot.slane %v753, 2
        %v755 = vadd.f32 %v753, %v754
        %v756 = vrot.slane %v755, 1
        %v757 = vadd.f32 %v755, %v756
        %s758 = vtos %v757
        %v759 = vrcp.pop 4096.0
        %s760 = vtos %v759
        %s761 = smul.f32 %s742, %s760
        %v762 = vrcp.pop 4096.0
        %s763 = vtos %v762
        %s764 = smul.f32 %s758, %s763
        %s765 = smul.f32 %s761, %s761
        %s766 = ssub.f32 %s764, %s765
        %s767 = smax.f32 %s766, 0.0
        %v768 = vstv %s761
        %v769 = vsub.f32 %v715, %v768
        %v770 = vsub.f32 %v717, %v768
        %v771 = vsub.f32 %v719, %v768
        %v772 = vsub.f32 %v721, %v768
        %s773 = sadd.f32 %s767, 1e-05
        %v774 = vstv %s773
        %v775 = vrsqrt.pop %v774
        %s776 = vtos %v775
        %v777 = vstv %s776
        %v778 = vmul.f32 %v769, %v777
        %v779 = vmul.f32 %v770, %v777
        %v780 = vmul.f32 %v771, %v777
        %v781 = vmul.f32 %v772, %v777
        %vm782 = vcmp.ge.f32.partialorder %v778, 0.0
        %vm783 = vcmp.ge.f32.partialorder %v779, 0.0
        %vm784 = vcmp.ge.f32.partialorder %v780, 0.0
        %vm785 = vcmp.ge.f32.partialorder %v781, 0.0
        %v786 = vmul.f32 %v778, 0.01
        %v787 = vmul.f32 %v779, 0.01
        %v788 = vmul.f32 %v780, 0.01
        %v789 = vmul.f32 %v781, 0.01
        %v790 = vsel %vm782, %v778, %v786
        %v791 = vsel %vm783, %v779, %v787
        %v792 = vsel %vm784, %v780, %v788
        %v793 = vsel %vm785, %v781, %v789
        %v794 = vld [vmem:[%s3] sm:$0xf]
        %v795 = vld [vmem:[%s3 + $0x4] sm:$0xf]
        %v796 = vpack.c.bf16 %v792, %v790
        %v797 = vpack.c.bf16 %v793, %v791
        %v798 = vld [vmem:[%s4] sm:$0xff]
        %v799 = vld [vmem:[%s4 + $0x8] sm:$0xff]
        %801 = vset.pattern.permute.xlu0 0
        %802 = vperm.xlu0 %801, %v798
        %v803 = vpop.permute.xlu0 %802
        %806 = vset.pattern.permute.xlu0 0
        %807 = vperm.xlu0 %806, %v799
        %v808 = vpop.permute.xlu0 %807
        %v812 = vunpack.c.l.b16 %v794
        %v813 = vunpack.c.l.b16 %v795
        %v814 = vpack.c.b16 %v813, %v812
        %v816 = vsel %vm474, %v814, 0
        %818 = vmatprep.subr.bf16.mxu0 %v797
        %819 = vmatpush1.bf16.msra.mxu0 %v796
        %820 = vmatprep.subr.bf16.mxu0 0
        %821 = vmatpush1.bf16.msra.mxu0 0
        %822 = vmatprep.subr.bf16.mxu0 0
        %823 = vmatpush1.bf16.msra.mxu0 0
        %824 = vmatprep.subr.bf16.mxu0 0
        %825 = vmatpush1.bf16.msra.mxu0 0
        %826 = vmatprep.subr.bf16.mxu0 0
        %827 = vmatpush1.bf16.msra.mxu0 0
        %828 = vmatprep.subr.bf16.mxu0 0
        %829 = vmatpush1.bf16.msra.mxu0 0
        %830 = vmatprep.subr.bf16.mxu0 0
        %831 = vmatpush1.bf16.msra.mxu0 0
        %832 = vmatprep.subr.bf16.mxu0 0
        %833 = vmatpush1.bf16.msra.mxu0 0
        %834 = vmatprep.subr.bf16.mxu0 0
        %835 = vmatpush1.bf16.msra.mxu0 0
        %836 = vmatprep.subr.bf16.mxu0 0
        %837 = vmatpush1.bf16.msra.mxu0 0
        %838 = vmatprep.subr.bf16.mxu0 0
        %839 = vmatpush1.bf16.msra.mxu0 0
        %840 = vmatprep.subr.bf16.mxu0 0
        %841 = vmatpush1.bf16.msra.mxu0 0
        %842 = vmatprep.subr.bf16.mxu0 0
        %843 = vmatpush1.bf16.msra.mxu0 0
        %844 = vmatprep.subr.bf16.mxu0 0
        %845 = vmatpush1.bf16.msra.mxu0 0
        %846 = vmatprep.subr.bf16.mxu0 0
        %847 = vmatpush1.bf16.msra.mxu0 0
        %848 = vmatprep.subr.bf16.mxu0 0
        %849 = vmatpush1.bf16.msra.mxu0 0
        %850 = vmatprep.mubr.bf16.mxu0 0
        %851 = vmatmul.mubr.bf16.gmra.mrb[0].mxu0 %v816
        %v852 = vpop.f32.mrb[0].mxu0
        %v853 = vadd.f32 %v803, %v852
        %v854 = vpop.f32.mrb[0].mxu0
        %v855 = vadd.f32 %v803, %v854
        %v856 = vpop.f32.mrb[0].mxu0
        %v857 = vadd.f32 %v808, %v856
        %v858 = vpop.f32.mrb[0].mxu0
        %v859 = vadd.f32 %v808, %v858
        %860 = vdwg.mxu0
        %v861 = vadd.f32 %v853, %v855
        %v862 = vadd.f32 %v861, %v857
        %v863 = vadd.f32 %v862, %v859
        %864 = vadd.xlane.f32.xlu0 %v863
        %v865 = vpop.xlane.xlu0 %864
        %v866 = vrot.slane %v865, 4
        %v867 = vadd.f32 %v865, %v866
        %v868 = vrot.slane %v867, 2
        %v869 = vadd.f32 %v867, %v868
        %v870 = vrot.slane %v869, 1
        %v871 = vadd.f32 %v869, %v870
        %s872 = vtos %v871
        %v873 = vmul.f32 %v853, %v853
        %v874 = vmul.f32 %v855, %v855
        %v875 = vmul.f32 %v857, %v857
        %v876 = vmul.f32 %v859, %v859
        %v877 = vadd.f32 %v873, %v874
        %v878 = vadd.f32 %v877, %v875
        %v879 = vadd.f32 %v878, %v876
        %880 = vadd.xlane.f32.xlu0 %v879
        %v881 = vpop.xlane.xlu0 %880
        %v882 = vrot.slane %v881, 4
        %v883 = vadd.f32 %v881, %v882
        %v884 = vrot.slane %v883, 2
        %v885 = vadd.f32 %v883, %v884
        %v886 = vrot.slane %v885, 1
        %v887 = vadd.f32 %v885, %v886
        %s888 = vtos %v887
        %v889 = vrcp.pop 4096.0
        %s890 = vtos %v889
        %s891 = smul.f32 %s872, %s890
        %v892 = vrcp.pop 4096.0
        %s893 = vtos %v892
        %s894 = smul.f32 %s888, %s893
        %s895 = smul.f32 %s891, %s891
        %s896 = ssub.f32 %s894, %s895
        %s897 = smax.f32 %s896, 0.0
        %v898 = vstv %s891
        %v899 = vsub.f32 %v853, %v898
        %v900 = vsub.f32 %v855, %v898
        %v901 = vsub.f32 %v857, %v898
        %v902 = vsub.f32 %v859, %v898
        %s903 = sadd.f32 %s897, 1e-05
        %v904 = vstv %s903
        %v905 = vrsqrt.pop %v904
        %s906 = vtos %v905
        %v907 = vstv %s906
        %v908 = vmul.f32 %v899, %v907
        %v909 = vmul.f32 %v900, %v907
        %v910 = vmul.f32 %v901, %v907
        %v911 = vmul.f32 %v902, %v907
        %vm912 = vcmp.ge.f32.partialorder %v908, 0.0
        %vm913 = vcmp.ge.f32.partialorder %v909, 0.0
        %vm914 = vcmp.ge.f32.partialorder %v910, 0.0
        %vm915 = vcmp.ge.f32.partialorder %v911, 0.0
        %v916 = vmul.f32 %v908, 0.01
        %v917 = vmul.f32 %v909, 0.01
        %v918 = vmul.f32 %v910, 0.01
        %v919 = vmul.f32 %v911, 0.01
        %v920 = vsel %vm912, %v908, %v916
        %v921 = vsel %vm913, %v909, %v917
        %v922 = vsel %vm914, %v910, %v918
        %v923 = vsel %vm915, %v911, %v919
        %924 = vst [vmem:[#allocation2 + $0x8] sm:$0xff] %v920
        %925 = vst [vmem:[#allocation2 + $0x10] sm:$0xff] %v921
        %926 = vst [vmem:[#allocation2 + $0x28] sm:$0xff] %v922
        %927 = vst [vmem:[#allocation2 + $0x30] sm:$0xff] %v923
        %v928 = vld [vmem:[#allocation2] sm:$0xff]
        %v929 = vld [vmem:[#allocation2 + $0x8] sm:$0xff]
        %v930 = vld [vmem:[#allocation2 + $0x10] sm:$0xff]
        %v931 = vld [vmem:[#allocation2 + $0x20] sm:$0xff]
        %v932 = vld [vmem:[#allocation2 + $0x28] sm:$0xff]
        %v933 = vld [vmem:[#allocation2 + $0x30] sm:$0xff]
        %940 = vrot.lane.b32.xlu0 %v928, 17
        %v941 = vpop.permute.xlu0 %940
        %942 = vrot.lane.b32.xlu0 %v929, 17
        %v943 = vpop.permute.xlu0 %942
        %944 = vrot.lane.b32.xlu0 %v930, 17
        %v945 = vpop.permute.xlu0 %944
        %946 = vrot.lane.b32.xlu0 %v931, 17
        %v947 = vpop.permute.xlu0 %946
        %948 = vrot.lane.b32.xlu0 %v932, 17
        %v949 = vpop.permute.xlu0 %948
        %950 = vrot.lane.b32.xlu0 %v933, 17
        %v951 = vpop.permute.xlu0 %950
        %v952 = vsel %vm450, %v941, %v943
        %v953 = vsel %vm450, %v943, %v945
        %v954 = vsel %vm450, %v947, %v949
        %v955 = vsel %vm450, %v949, %v951
        %v960 = vsel %vm439, %v952, 0.0
        %v961 = vsel %vm440, %v953, 0.0
        %v962 = vsel %vm439, %v954, 0.0
        %v963 = vsel %vm440, %v955, 0.0
        %964 = vst [vmem:[#allocation3] sm:$0xff] %v960
        %965 = vst [vmem:[#allocation3 + $0x8] sm:$0xff] %v961
        %966 = vst [vmem:[#allocation3 + $0x10] sm:$0xff] %v962
        %967 = vst [vmem:[#allocation3 + $0x18] sm:$0xff] %v963
        %v968 = vld [vmem:[#allocation2] sm:$0xff]
        %v969 = vld [vmem:[#allocation2 + $0x8] sm:$0xff]
        %v970 = vld [vmem:[#allocation2 + $0x10] sm:$0xff]
        %v971 = vld [vmem:[#allocation2 + $0x20] sm:$0xff]
        %v972 = vld [vmem:[#allocation2 + $0x28] sm:$0xff]
        %v973 = vld [vmem:[#allocation2 + $0x30] sm:$0xff]
        %980 = vrot.lane.b32.xlu0 %v968, 16
        %v981 = vpop.permute.xlu0 %980
        %982 = vrot.lane.b32.xlu0 %v969, 16
        %v983 = vpop.permute.xlu0 %982
        %984 = vrot.lane.b32.xlu0 %v970, 16
        %v985 = vpop.permute.xlu0 %984
        %986 = vrot.lane.b32.xlu0 %v971, 16
        %v987 = vpop.permute.xlu0 %986
        %988 = vrot.lane.b32.xlu0 %v972, 16
        %v989 = vpop.permute.xlu0 %988
        %990 = vrot.lane.b32.xlu0 %v973, 16
        %v991 = vpop.permute.xlu0 %990
        %v992 = vsel %vm474, %v981, %v983
        %v993 = vsel %vm474, %v983, %v985
        %v994 = vsel %vm474, %v987, %v989
        %v995 = vsel %vm474, %v989, %v991
        %1000 = vst [vmem:[#allocation3 + $0x20] sm:$0xff] %v992
        %1001 = vst [vmem:[#allocation3 + $0x28] sm:$0xff] %v993
        %1002 = vst [vmem:[#allocation3 + $0x30] sm:$0xff] %v994
        %1003 = vst [vmem:[#allocation3 + $0x38] sm:$0xff] %v995
        %v1004 = vld [vmem:[#allocation2] sm:$0xff]
        %v1005 = vld [vmem:[#allocation2 + $0x8] sm:$0xff]
        %v1006 = vld [vmem:[#allocation2 + $0x10] sm:$0xff]
        %v1007 = vld [vmem:[#allocation2 + $0x20] sm:$0xff]
        %v1008 = vld [vmem:[#allocation2 + $0x28] sm:$0xff]
        %v1009 = vld [vmem:[#allocation2 + $0x30] sm:$0xff]
        %1016 = vrot.lane.b32.xlu0 %v1004, 15
        %v1017 = vpop.permute.xlu0 %1016
        %1018 = vrot.lane.b32.xlu0 %v1005, 15
        %v1019 = vpop.permute.xlu0 %1018
        %1020 = vrot.lane.b32.xlu0 %v1006, 15
        %v1021 = vpop.permute.xlu0 %1020
        %1022 = vrot.lane.b32.xlu0 %v1007, 15
        %v1023 = vpop.permute.xlu0 %1022
        %1024 = vrot.lane.b32.xlu0 %v1008, 15
        %v1025 = vpop.permute.xlu0 %1024
        %1026 = vrot.lane.b32.xlu0 %v1009, 15
        %v1027 = vpop.permute.xlu0 %1026
        %v1028 = vsel %vm493, %v1017, %v1019
        %v1029 = vsel %vm493, %v1019, %v1021
        %v1030 = vsel %vm493, %v1023, %v1025
        %v1031 = vsel %vm493, %v1025, %v1027
        %v1036 = vsel %vm332, %v1028, 0.0
        %v1037 = vsel %vm333, %v1029, 0.0
        %v1038 = vsel %vm332, %v1030, 0.0
        %v1039 = vsel %vm333, %v1031, 0.0
        %1040 = vst [vmem:[#allocation3 + $0x40] sm:$0xff] %v1036
        %1041 = vst [vmem:[#allocation3 + $0x48] sm:$0xff] %v1037
        %1042 = vst [vmem:[#allocation3 + $0x50] sm:$0xff] %v1038
        %1043 = vst [vmem:[#allocation3 + $0x58] sm:$0xff] %v1039
        %v1044 = vld [vmem:[#allocation2] sm:$0xff]
        %v1045 = vld [vmem:[#allocation2 + $0x8] sm:$0xff]
        %v1046 = vld [vmem:[#allocation2 + $0x10] sm:$0xff]
        %v1047 = vld [vmem:[#allocation2 + $0x20] sm:$0xff]
        %v1048 = vld [vmem:[#allocation2 + $0x28] sm:$0xff]
        %v1049 = vld [vmem:[#allocation2 + $0x30] sm:$0xff]
        %1056 = vrot.lane.b32.xlu0 %v1044, 1
        %v1057 = vpop.permute.xlu0 %1056
        %1058 = vrot.lane.b32.xlu0 %v1045, 1
        %v1059 = vpop.permute.xlu0 %1058
        %1060 = vrot.lane.b32.xlu0 %v1046, 1
        %v1061 = vpop.permute.xlu0 %1060
        %1062 = vrot.lane.b32.xlu0 %v1047, 1
        %v1063 = vpop.permute.xlu0 %1062
        %1064 = vrot.lane.b32.xlu0 %v1048, 1
        %v1065 = vpop.permute.xlu0 %1064
        %1066 = vrot.lane.b32.xlu0 %v1049, 1
        %v1067 = vpop.permute.xlu0 %1066
        %v1068 = vsel %vm514, %v1057, %v1059
        %v1069 = vsel %vm514, %v1059, %v1061
        %v1070 = vsel %vm514, %v1063, %v1065
        %v1071 = vsel %vm514, %v1065, %v1067
        %v1076 = vsel %vm439, %v1068, 0.0
        %v1077 = vsel %vm440, %v1069, 0.0
        %v1078 = vsel %vm439, %v1070, 0.0
        %v1079 = vsel %vm440, %v1071, 0.0
        %1080 = vst [vmem:[#allocation3 + $0x60] sm:$0xff] %v1076
        %1081 = vst [vmem:[#allocation3 + $0x68] sm:$0xff] %v1077
        %1082 = vst [vmem:[#allocation3 + $0x70] sm:$0xff] %v1078
        %1083 = vst [vmem:[#allocation3 + $0x78] sm:$0xff] %v1079
        %v1084 = vld [vmem:[#allocation2 + $0x8] sm:$0xff]
        %v1085 = vld [vmem:[#allocation2 + $0x10] sm:$0xff]
        %v1086 = vld [vmem:[#allocation2 + $0x28] sm:$0xff]
        %v1087 = vld [vmem:[#allocation2 + $0x30] sm:$0xff]
        %1088 = vst [vmem:[#allocation3 + $0x80] sm:$0xff] %v1084
        %1089 = vst [vmem:[#allocation3 + $0x88] sm:$0xff] %v1085
        %1090 = vst [vmem:[#allocation3 + $0x90] sm:$0xff] %v1086
        %1091 = vst [vmem:[#allocation3 + $0x98] sm:$0xff] %v1087
        %v1092 = vld [vmem:[#allocation2 + $0x8] sm:$0xff]
        %v1093 = vld [vmem:[#allocation2 + $0x10] sm:$0xff]
        %v1094 = vld [vmem:[#allocation2 + $0x18] sm:$0xff]
        %v1095 = vld [vmem:[#allocation2 + $0x28] sm:$0xff]
        %v1096 = vld [vmem:[#allocation2 + $0x30] sm:$0xff]
        %v1097 = vld [vmem:[#allocation2 + $0x38] sm:$0xff]
        %1104 = vrot.lane.b32.xlu0 %v1092, 127
        %v1105 = vpop.permute.xlu0 %1104
        %1106 = vrot.lane.b32.xlu0 %v1093, 127
        %v1107 = vpop.permute.xlu0 %1106
        %1108 = vrot.lane.b32.xlu0 %v1094, 127
        %v1109 = vpop.permute.xlu0 %1108
        %1110 = vrot.lane.b32.xlu0 %v1095, 127
        %v1111 = vpop.permute.xlu0 %1110
        %1112 = vrot.lane.b32.xlu0 %v1096, 127
        %v1113 = vpop.permute.xlu0 %1112
        %1114 = vrot.lane.b32.xlu0 %v1097, 127
        %v1115 = vpop.permute.xlu0 %1114
        %v1116 = vsel %vm343, %v1105, %v1107
        %v1117 = vsel %vm343, %v1107, %v1109
        %v1118 = vsel %vm343, %v1111, %v1113
        %v1119 = vsel %vm343, %v1113, %v1115
        %v1124 = vsel %vm332, %v1116, 0.0
        %v1125 = vsel %vm333, %v1117, 0.0
        %v1126 = vsel %vm332, %v1118, 0.0
        %v1127 = vsel %vm333, %v1119, 0.0
        %1128 = vst [vmem:[#allocation3 + $0xa0] sm:$0xff] %v1124
        %1129 = vst [vmem:[#allocation3 + $0xa8] sm:$0xff] %v1125
        %1130 = vst [vmem:[#allocation3 + $0xb0] sm:$0xff] %v1126
        %1131 = vst [vmem:[#allocation3 + $0xb8] sm:$0xff] %v1127
        %v1132 = vld [vmem:[#allocation2 + $0x8] sm:$0xff]
        %v1133 = vld [vmem:[#allocation2 + $0x10] sm:$0xff]
        %v1134 = vld [vmem:[#allocation2 + $0x18] sm:$0xff]
        %v1135 = vld [vmem:[#allocation2 + $0x28] sm:$0xff]
        %v1136 = vld [vmem:[#allocation2 + $0x30] sm:$0xff]
        %v1137 = vld [vmem:[#allocation2 + $0x38] sm:$0xff]
        %1144 = vrot.lane.b32.xlu0 %v1132, 113
        %v1145 = vpop.permute.xlu0 %1144
        %1146 = vrot.lane.b32.xlu0 %v1133, 113
        %v1147 = vpop.permute.xlu0 %1146
        %1148 = vrot.lane.b32.xlu0 %v1134, 113
        %v1149 = vpop.permute.xlu0 %1148
        %1150 = vrot.lane.b32.xlu0 %v1135, 113
        %v1151 = vpop.permute.xlu0 %1150
        %1152 = vrot.lane.b32.xlu0 %v1136, 113
        %v1153 = vpop.permute.xlu0 %1152
        %1154 = vrot.lane.b32.xlu0 %v1137, 113
        %v1155 = vpop.permute.xlu0 %1154
        %v1156 = vsel %vm571, %v1145, %v1147
        %v1157 = vsel %vm571, %v1147, %v1149
        %v1158 = vsel %vm571, %v1151, %v1153
        %v1159 = vsel %vm571, %v1153, %v1155
        %v1164 = vsel %vm439, %v1156, 0.0
        %v1165 = vsel %vm440, %v1157, 0.0
        %v1166 = vsel %vm439, %v1158, 0.0
        %v1167 = vsel %vm440, %v1159, 0.0
        %1168 = vst [vmem:[#allocation3 + $0xc0] sm:$0xff] %v1164
        %1169 = vst [vmem:[#allocation3 + $0xc8] sm:$0xff] %v1165
        %1170 = vst [vmem:[#allocation3 + $0xd0] sm:$0xff] %v1166
        %1171 = vst [vmem:[#allocation3 + $0xd8] sm:$0xff] %v1167
        %v1172 = vld [vmem:[#allocation2 + $0x8] sm:$0xff]
        %v1173 = vld [vmem:[#allocation2 + $0x10] sm:$0xff]
        %v1174 = vld [vmem:[#allocation2 + $0x18] sm:$0xff]
        %v1175 = vld [vmem:[#allocation2 + $0x28] sm:$0xff]
        %v1176 = vld [vmem:[#allocation2 + $0x30] sm:$0xff]
        %v1177 = vld [vmem:[#allocation2 + $0x38] sm:$0xff]
        %1184 = vrot.lane.b32.xlu0 %v1172, 112
        %v1185 = vpop.permute.xlu0 %1184
        %1186 = vrot.lane.b32.xlu0 %v1173, 112
        %v1187 = vpop.permute.xlu0 %1186
        %1188 = vrot.lane.b32.xlu0 %v1174, 112
        %v1189 = vpop.permute.xlu0 %1188
        %1190 = vrot.lane.b32.xlu0 %v1175, 112
        %v1191 = vpop.permute.xlu0 %1190
        %1192 = vrot.lane.b32.xlu0 %v1176, 112
        %v1193 = vpop.permute.xlu0 %1192
        %1194 = vrot.lane.b32.xlu0 %v1177, 112
        %v1195 = vpop.permute.xlu0 %1194
        %v1196 = vsel %vm362, %v1185, %v1187
        %v1197 = vsel %vm362, %v1187, %v1189
        %v1198 = vsel %vm362, %v1191, %v1193
        %v1199 = vsel %vm362, %v1193, %v1195
        %1204 = vst [vmem:[#allocation3 + $0xe0] sm:$0xff] %v1196
        %1205 = vst [vmem:[#allocation3 + $0xe8] sm:$0xff] %v1197
        %1206 = vst [vmem:[#allocation3 + $0xf0] sm:$0xff] %v1198
        %1207 = vst [vmem:[#allocation3 + $0xf8] sm:$0xff] %v1199
        %v1208 = vld [vmem:[#allocation2 + $0x8] sm:$0xff]
        %v1209 = vld [vmem:[#allocation2 + $0x10] sm:$0xff]
        %v1210 = vld [vmem:[#allocation2 + $0x18] sm:$0xff]
        %v1211 = vld [vmem:[#allocation2 + $0x28] sm:$0xff]
        %v1212 = vld [vmem:[#allocation2 + $0x30] sm:$0xff]
        %v1213 = vld [vmem:[#allocation2 + $0x38] sm:$0xff]
        %1220 = vrot.lane.b32.xlu0 %v1208, 111
        %v1221 = vpop.permute.xlu0 %1220
        %1222 = vrot.lane.b32.xlu0 %v1209, 111
        %v1223 = vpop.permute.xlu0 %1222
        %1224 = vrot.lane.b32.xlu0 %v1210, 111
        %v1225 = vpop.permute.xlu0 %1224
        %1226 = vrot.lane.b32.xlu0 %v1211, 111
        %v1227 = vpop.permute.xlu0 %1226
        %1228 = vrot.lane.b32.xlu0 %v1212, 111
        %v1229 = vpop.permute.xlu0 %1228
        %1230 = vrot.lane.b32.xlu0 %v1213, 111
        %v1231 = vpop.permute.xlu0 %1230
        %v1232 = vsel %vm391, %v1221, %v1223
        %v1233 = vsel %vm391, %v1223, %v1225
        %v1234 = vsel %vm391, %v1227, %v1229
        %v1235 = vsel %vm391, %v1229, %v1231
        %v1240 = vsel %vm332, %v1232, 0.0
        %v1241 = vsel %vm333, %v1233, 0.0
        %v1242 = vsel %vm332, %v1234, 0.0
        %v1243 = vsel %vm333, %v1235, 0.0
        %1244 = vst [vmem:[#allocation3 + $0x100] sm:$0xff] %v1240
        %1245 = vst [vmem:[#allocation3 + $0x108] sm:$0xff] %v1241
        %1246 = vst [vmem:[#allocation3 + $0x110] sm:$0xff] %v1242
        %1247 = vst [vmem:[#allocation3 + $0x118] sm:$0xff] %v1243
        %v1248 = vld [vmem:[#allocation3] sm:$0xff]
        %v1249 = vld [vmem:[#allocation3 + $0x8] sm:$0xff]
        %v1250 = vld [vmem:[#allocation3 + $0x10] sm:$0xff]
        %v1251 = vld [vmem:[#allocation3 + $0x18] sm:$0xff]
        %v1252 = vld [vmem:[#allocation3 + $0x20] sm:$0xff]
        %v1253 = vld [vmem:[#allocation3 + $0x28] sm:$0xff]
        %v1254 = vld [vmem:[#allocation3 + $0x30] sm:$0xff]
        %v1255 = vld [vmem:[#allocation3 + $0x38] sm:$0xff]
        %v1256 = vld [vmem:[#allocation3 + $0x40] sm:$0xff]
        %v1257 = vld [vmem:[#allocation3 + $0x48] sm:$0xff]
        %v1258 = vld [vmem:[#allocation3 + $0x50] sm:$0xff]
        %v1259 = vld [vmem:[#allocation3 + $0x58] sm:$0xff]
        %v1260 = vld [vmem:[#allocation3 + $0x60] sm:$0xff]
        %v1261 = vld [vmem:[#allocation3 + $0x68] sm:$0xff]
        %v1262 = vld [vmem:[#allocation3 + $0x70] sm:$0xff]
        %v1263 = vld [vmem:[#allocation3 + $0x78] sm:$0xff]
        %v1264 = vld [vmem:[#allocation3 + $0x80] sm:$0xff]
        %v1265 = vld [vmem:[#allocation3 + $0x88] sm:$0xff]
        %v1266 = vld [vmem:[#allocation3 + $0x90] sm:$0xff]
        %v1267 = vld [vmem:[#allocation3 + $0x98] sm:$0xff]
        %v1268 = vld [vmem:[#allocation3 + $0xa0] sm:$0xff]
        %v1269 = vld [vmem:[#allocation3 + $0xa8] sm:$0xff]
        %v1270 = vld [vmem:[#allocation3 + $0xb0] sm:$0xff]
        %v1271 = vld [vmem:[#allocation3 + $0xb8] sm:$0xff]
        %v1272 = vld [vmem:[#allocation3 + $0xc0] sm:$0xff]
        %v1273 = vld [vmem:[#allocation3 + $0xc8] sm:$0xff]
        %v1274 = vld [vmem:[#allocation3 + $0xd0] sm:$0xff]
        %v1275 = vld [vmem:[#allocation3 + $0xd8] sm:$0xff]
        %v1276 = vld [vmem:[#allocation3 + $0xe0] sm:$0xff]
        %v1277 = vld [vmem:[#allocation3 + $0xe8] sm:$0xff]
        %v1278 = vld [vmem:[#allocation3 + $0xf0] sm:$0xff]
        %v1279 = vld [vmem:[#allocation3 + $0xf8] sm:$0xff]
        %v1280 = vld [vmem:[#allocation3 + $0x100] sm:$0xff]
        %v1281 = vld [vmem:[#allocation3 + $0x108] sm:$0xff]
        %v1282 = vld [vmem:[#allocation3 + $0x110] sm:$0xff]
        %v1283 = vld [vmem:[#allocation3 + $0x118] sm:$0xff]
        %v1284 = vpack.c.bf16 %v1250, %v1248
        %v1285 = vpack.c.bf16 %v1251, %v1249
        %v1286 = vpack.c.bf16 %v1254, %v1252
        %v1287 = vpack.c.bf16 %v1255, %v1253
        %v1288 = vpack.c.bf16 %v1258, %v1256
        %v1289 = vpack.c.bf16 %v1259, %v1257
        %v1290 = vpack.c.bf16 %v1262, %v1260
        %v1291 = vpack.c.bf16 %v1263, %v1261
        %v1292 = vpack.c.bf16 %v1266, %v1264
        %v1293 = vpack.c.bf16 %v1267, %v1265
        %v1294 = vpack.c.bf16 %v1270, %v1268
        %v1295 = vpack.c.bf16 %v1271, %v1269
        %v1296 = vpack.c.bf16 %v1274, %v1272
        %v1297 = vpack.c.bf16 %v1275, %v1273
        %v1298 = vpack.c.bf16 %v1278, %v1276
        %v1299 = vpack.c.bf16 %v1279, %v1277
        %v1300 = vpack.c.bf16 %v1282, %v1280
        %v1301 = vpack.c.bf16 %v1283, %v1281
        %v1302 = vld [vmem:[%s5] sm:$0xff]
        %v1303 = vld [vmem:[%s6] sm:$0xff]
        %1305 = vset.pattern.permute.xlu0 0
        %1306 = vperm.xlu0 %1305, %v1303
        %v1307 = vpop.permute.xlu0 %1306
        %v1310 = vunpack.c.l.b16 %v1302
        %v1311 = vunpack.c.h.b16 %v1302
        %v1312 = vpack.c.b16 %v1310, %v1310
        %v1313 = vpack.c.b16 %v1311, %v1311
        %v1316 = vsel %vm474, %v1313, 0
        %1318 = vmatprep.subr.bf16.mxu0 %v1285
        %1319 = vmatpush1.bf16.msra.mxu0 %v1284
        %1320 = vmatprep.subr.bf16.mxu0 %v1287
        %1321 = vmatpush1.bf16.msra.mxu0 %v1286
        %1322 = vmatprep.subr.bf16.mxu0 %v1289
        %1323 = vmatpush1.bf16.msra.mxu0 %v1288
        %1324 = vmatprep.subr.bf16.mxu0 %v1291
        %1325 = vmatpush1.bf16.msra.mxu0 %v1290
        %1326 = vmatprep.subr.bf16.mxu0 %v1293
        %1327 = vmatpush1.bf16.msra.mxu0 %v1292
        %1328 = vmatprep.subr.bf16.mxu0 %v1295
        %1329 = vmatpush1.bf16.msra.mxu0 %v1294
        %1330 = vmatprep.subr.bf16.mxu0 %v1297
        %1331 = vmatpush1.bf16.msra.mxu0 %v1296
        %1332 = vmatprep.subr.bf16.mxu0 %v1299
        %1333 = vmatpush1.bf16.msra.mxu0 %v1298
        %1334 = vmatprep.subr.bf16.mxu0 %v1301
        %1335 = vmatpush1.bf16.msra.mxu0 %v1300
        %1336 = vmatprep.subr.bf16.mxu0 0
        %1337 = vmatpush1.bf16.msra.mxu0 0
        %1338 = vmatprep.subr.bf16.mxu0 0
        %1339 = vmatpush1.bf16.msra.mxu0 0
        %1340 = vmatprep.subr.bf16.mxu0 0
        %1341 = vmatpush1.bf16.msra.mxu0 0
        %1342 = vmatprep.subr.bf16.mxu0 0
        %1343 = vmatpush1.bf16.msra.mxu0 0
        %1344 = vmatprep.subr.bf16.mxu0 0
        %1345 = vmatpush1.bf16.msra.mxu0 0
        %1346 = vmatprep.subr.bf16.mxu0 0
        %1347 = vmatpush1.bf16.msra.mxu0 0
        %1348 = vmatprep.subr.bf16.mxu0 0
        %1349 = vmatpush1.bf16.msra.mxu0 0
        %1350 = vmatprep.mubr.bf16.mxu0 %v1316
        %1351 = vmatmul.mubr.bf16.gmra.mrb[0].mxu0 %v1312
        %v1352 = vpop.f32.mrb[0].mxu0
        %v1353 = vadd.f32 %v1307, %v1352
        %v1354 = vpop.f32.mrb[0].mxu0
        %v1355 = vadd.f32 %v1307, %v1354
        %v1356 = vpop.f32.mrb[0].mxu0
        %v1357 = vpop.f32.mrb[0].mxu0
        %1358 = vdwg.mxu0
        %v1359 = vadd.f32 %v725, %v1353
        %v1360 = vadd.f32 %v727, %v1355
        %1361 = vst [vmem:[%s271] sm:$0xff] %v1359
        %1362 = vst [vmem:[%s271 + $0x8] sm:$0xff] %v1360
        %s1363 = sand.u32 %s181, 1
        %s1364 = scalar_lea.sflag [#allocation5], %s1363
        %s1365 = sand.u32 %s181, 1
        %s1366 = smul.addr %s1365, 16
        %s1367 = scalar_lea.vmem [#allocation4], %s1366
        // Predicated region
        $region49: #{tpu_custom_call.1} parent=47 // pred_check
          %p1368 = pneg %p191
        $region50: #{tpu_custom_call.1} parent=47 // pred_check_branch
          %1370 = sbr.rel (%p1368) target = $region52
        $region51: #{tpu_custom_call.1} parent=47 // pred_region
          %s1372 = ssub.s32 256, 256
          %1373 = vsyncadd %s1364, %s1372
          %s1374 = smul.addr %s21, 2
          %s1375 = smul.addr %s1374, 128
          %s1376 = scalar_lea.hbm %s7, %s1375
          %s1378 = sshll.u32 %s1367, 4
          %s1379 = int_to_ptr.vmem [resolvable:$true] %s1378
          %1381 = dma.vmem_to_hbm [thread:$0]  %s1379, 256, %s1376, %s1364
        $region52: #{tpu_custom_call.1} parent=47 // pred_fallthru
          _
      $region48: #{tpu_custom_call.1} parent=5 // pred_fallthru
        _
      %p1382 = scmp.le.s32.totalorder 2, %s16
      // Predicated region
      $region53: #{tpu_custom_call.1} parent=5 // pred_check
        %p1383 = pneg %p1382
      $region54: #{tpu_custom_call.1} parent=5 // pred_check_branch
        %1385 = sbr.rel (%p1383) target = $region56
      $region55: #{tpu_custom_call.1} parent=5 // pred_region
        %s1386 = ssub.s32 %s16, 2
        // Predicated region
        $region57: #{tpu_custom_call.1} parent=55 // pred_check
          %p1387 = pneg %p197
        $region58: #{tpu_custom_call.1} parent=55 // pred_check_branch
          %1389 = sbr.rel (%p1387) target = $region60
        $region59: #{tpu_custom_call.1} parent=55 // pred_region
          %s1390 = sand.u32 %s182, 1
          %s1391 = scalar_lea.sflag [#allocation5], %s1390
          %s1392 = sand.u32 %s182, 1
          %s1393 = smul.addr %s1392, 16
          %s1394 = scalar_lea.vmem [#allocation4], %s1393
          %1395 = dma.done %s1391, 256
        $region60: #{tpu_custom_call.1} parent=55 // pred_fallthru
          _
      $region56: #{tpu_custom_call.1} parent=5 // pred_fallthru
        _
    $region6: #{tpu_custom_call.1} parent=1 // loop_footer
      %s20 = sadd.s32 1, %s16
    $region7: #{tpu_custom_call.1} parent=1 // loop_footer_branch
      %15 = sbr.rel target = $region3
    $region8: #{tpu_custom_call.1} parent=1 // loop_exit
      _
    %1396 = vsyncpa [#allocation5], 1
    %s1397 = scalar_lea.sflag [#allocation5], 1
    %1398 = vsyncpa %s1397, 1

</llo_original>
